<compile_context>
chip_gen: v6e
topology: v6e:2x2x1
jax: 0.10.0
libtpu: 0.0.40
codegen_flags: <defaults>
</compile_context>

<pallas_src>
import functools

import jax
import jax.numpy as jnp
from jax.experimental import pallas as pl
from jax.experimental.pallas import tpu as pltpu

_LANE = 128


def _round_up(x, m):
    return (x + m - 1) // m * m


def _vmem_budget():
    """Per-generation VMEM planning budget (with headroom) and physical capacity."""
    cap = 64 * 1024 * 1024            # conservative fallback = v7x per-core VMEM
    try:
        info = pltpu.get_tpu_info()
        cap_attr = getattr(info, "vmem_capacity_bytes", None)
        if cap_attr:
            cap = int(cap_attr)
    except Exception:
        pass
    # ~25% headroom for compiler temporaries; never plan for more than 80 MiB even on
    # 128 MiB parts (v5e/v6e).  On v7x (64 MiB) this yields a 48 MiB budget.
    return min(cap * 3 // 4, 80 * 1024 * 1024), cap


# ----------------------------------------------------------------------------
# Fused Pallas kernel: all SAGE layers (pre-activations only)
# ----------------------------------------------------------------------------
def _student_fused_kernel(x0_hbm, adj_ref, invdeg_ref, w_ref, b_ref,
                          pre_ref,
                          xa_ref, xb_ref, sem_ref, *adj_scr,
                          tm, neg_slope, adj_resident):
    l = pl.program_id(0)              # layer index (outermost, sequential carry)
    i = pl.program_id(1)              # node row-tile index
    last_l = pl.num_programs(0) - 1

    # One-time setup at the very first grid step: stage the input features into
    # activation slot A (NaN-cleaned); if the whole int8 adjacency fits VMEM, pull it
    # in once so no layer ever re-streams it from HBM.
    @pl.when((l == 0) & (i == 0))
    def _init():
        cp_x = pltpu.make_async_copy(x0_hbm, xa_ref, sem_ref.at[0])
        cp_x.start()
        if adj_resident:
            cp_a = pltpu.make_async_copy(adj_ref, adj_scr[0], sem_ref.at[1])
            cp_a.start()
            cp_a.wait()
        cp_x.wait()
        x0 = xa_ref[...]
        xa_ref[...] = jnp.where(jnp.isnan(x0), jnp.zeros_like(x0), x0)

    row0 = pl.multiple_of(i * tm, tm)
    adj_src = adj_scr[0] if adj_resident else adj_ref

    def layer(x_src, x_dst):
        # Mean aggregation: int8 Adj rows -> bf16 on the fly, MXU matmul with f32
        # accumulation, then scale by the precomputed 1/clamp(deg, 1).
        if adj_resident:
            adj_rows = adj_src[pl.ds(row0, tm), :]           # (TM, N_pad) int8
        else:
            adj_rows = adj_src[...]                          # pipelined (TM, N_pad) tile
        agg = jnp.dot(adj_rows.astype(jnp.bfloat16), x_src[...],
                      preferred_element_type=jnp.float32)    # (TM, F) f32
        agg = agg * invdeg_ref[...]

        # Merged matmul: [agg | x] @ [W_rel ; W_root]  (K = 2*128, lane-dense output)
        x_rows = x_src[pl.ds(row0, tm), :]                   # (TM, F) bf16
        cat = jnp.concatenate([agg.astype(jnp.bfloat16), x_rows], axis=-1)
        pre = jnp.dot(cat, w_ref[0],
                      preferred_element_type=jnp.float32) + b_ref[0]
        pre_ref[0] = pre                                     # middle representation (only output)

        # TODO(synk): F.dropout with training=True not implemented (eval-mode identity).
        # Carry leaky_relu(pre) to the next layer only; the final activation and link
        # head are derived from pre in the wrapper (no per-layer HBM writeback).
        @pl.when(l < last_l)
        def _():
            act = jnp.where(pre >= 0, pre, neg_slope * pre)
            x_dst[pl.ds(row0, tm), :] = act.astype(jnp.bfloat16)

    # Ping-pong the activation scratch by layer parity (static slot indices).
    @pl.when(l % 2 == 0)
    def _even():
        layer(xa_ref, xb_ref)

    @pl.when(l % 2 == 1)
    def _odd():
        layer(xb_ref, xa_ref)


# ----------------------------------------------------------------------------
# Wrapper: pad/pack params, size tiles against the VMEM budget, slice outputs
# ----------------------------------------------------------------------------
def student_forward(X, Adj, params, *, binary_adj=True, force_streamed=False):
    """Student.forward in eval mode (dropout = identity).

    binary_adj=True stores the adjacency as int8 (exact for 0/1 adjacency, as in T2_GNN);
    set False to keep bf16 storage for weighted adjacencies.
    """
    N, f_in = X.shape
    layers = params["layers"]
    L = len(layers)
    hid_dims = [w_rel.shape[1] for (w_rel, _, _) in layers]

    f_max = _round_up(max([f_in] + hid_dims), _LANE)       # feature dims -> 128-lane dense
    n_pad = _round_up(N, _LANE)
    adj_dtype = jnp.int8 if binary_adj else jnp.bfloat16
    adj_isz = 1 if binary_adj else 2

    budget, vmem_cap = _vmem_budget()

    def est_vmem(tm_, resident_):
        adj_vmem = n_pad * n_pad * adj_isz if resident_ else 2 * tm_ * n_pad * adj_isz
        act_scratch = 2 * n_pad * f_max * 2                 # bf16 ping-pong
        out_blk = 2 * tm_ * f_max * 4                       # pre output (double-buffered)
        param_blk = 2 * (2 * f_max * f_max * 2 + f_max * 4) + 2 * tm_ * 4
        temps = (tm_ * n_pad * 2                            # adj -> bf16 cast temp
                 + 6 * tm_ * f_max * 4                      # agg/pre/act/cat temporaries
                 + n_pad * f_max * 2)                       # x_src operand value
        return adj_vmem + act_scratch + out_blk + param_blk + temps + (1 << 20)

    # Row-tile size: always an exact divisor of n_pad (no dropped rows) and sized
    # against the per-generation VMEM budget.
    if n_pad <= 512:
        tm = n_pad
    else:
        tm = 128
        for t in (512, 256, 128):
            if n_pad % t == 0 and est_vmem(t, False) <= budget:
                tm = t
                break
    n_tiles = n_pad // tm

    adj_resident = (not force_streamed) and est_vmem(tm, True) <= budget
    est_bytes = est_vmem(tm, adj_resident)
    vmem_limit = int(min(max(est_bytes * 3 // 2, 32 << 20), vmem_cap * 4 // 5))

    # ---- pack + zero-pad parameters (padded rows/cols are exactly inert) ----
    w_cat = jnp.zeros((L, 2 * f_max, f_max), jnp.float32)
    b_all = jnp.zeros((L, 1, f_max), jnp.float32)
    for li, (w_rel, b_rel, w_root) in enumerate(layers):
        fi, fo = w_rel.shape
        w_cat = w_cat.at[li, :fi, :fo].set(w_rel)                       # aggregated path
        w_cat = w_cat.at[li, f_max:f_max + fi, :fo].set(w_root)         # root (skip) path
        b_all = b_all.at[li, 0, :fo].set(b_rel[0])
    w_cat = w_cat.astype(jnp.bfloat16)

    # ---- pad inputs; degree reciprocal computed ONCE here ----
    x0 = jnp.zeros((n_pad, f_max), jnp.float32).at[:N, :f_in].set(X).astype(jnp.bfloat16)
    adj_p = jnp.zeros((n_pad, n_pad), jnp.float32).at[:N, :N].set(Adj)
    inv_deg = 1.0 / jnp.maximum(jnp.sum(adj_p, axis=-1, keepdims=True), 1.0)
    adj_store = adj_p.astype(adj_dtype)                     # 0/1 exact in int8 (and in bf16)

    flops = L * (2 * n_pad * n_pad * f_max + 2 * n_pad * (2 * f_max) * f_max)
    bytes_accessed = ((1 if adj_resident else L) * n_pad * n_pad * adj_isz
                      + n_pad * f_max * 2
                      + L * (2 * f_max * f_max * 2 + f_max * 4 + n_pad * 4)
                      + L * n_pad * f_max * 4)
    cost = pl.CostEstimate(flops=int(flops), transcendentals=0,
                           bytes_accessed=int(bytes_accessed))

    if adj_resident:
        adj_spec = pl.BlockSpec(memory_space=pl.ANY)        # DMA'd once to a VMEM scratch
    else:
        adj_spec = pl.BlockSpec((tm, n_pad), lambda l, i: (i, 0))   # streamed row tiles

    scratch_shapes = [
        pltpu.VMEM((n_pad, f_max), jnp.bfloat16),           # activation slot A
        pltpu.VMEM((n_pad, f_max), jnp.bfloat16),           # activation slot B
        pltpu.SemaphoreType.DMA((2,)),                      # x0 / Adj staging copies
    ]
    if adj_resident:
        scratch_shapes.append(pltpu.VMEM((n_pad, n_pad), adj_dtype))

    kernel = functools.partial(_student_fused_kernel, tm=tm, neg_slope=0.01,
                               adj_resident=adj_resident)

    pre_all = pl.pallas_call(
        kernel,
        out_shape=jax.ShapeDtypeStruct((L, n_pad, f_max), jnp.float32),
        grid_spec=pltpu.PrefetchScalarGridSpec(
            num_scalar_prefetch=0,
            grid=(L, n_tiles),
            in_specs=[
                pl.BlockSpec(memory_space=pl.ANY),                            # x0 (copied once)
                adj_spec,                                                     # adjacency
                pl.BlockSpec((tm, 1), lambda l, i: (i, 0)),                   # 1/deg
                pl.BlockSpec((1, 2 * f_max, f_max), lambda l, i: (l, 0, 0)),  # [W_rel; W_root]
                pl.BlockSpec((1, 1, f_max), lambda l, i: (l, 0, 0)),          # b_rel
            ],
            out_specs=pl.BlockSpec((1, tm, f_max), lambda l, i: (l, i, 0)),
            scratch_shapes=scratch_shapes,
        ),
        compiler_params=pltpu.CompilerParams(
            # Layer axis is a sequential carry through the VMEM activation scratch and all
            # row tiles share that scratch -> both axes must stay on one TensorCore.
            dimension_semantics=("arbitrary", "arbitrary"),
            vmem_limit_bytes=vmem_limit,
        ),
        cost_estimate=cost,
    )(x0, adj_store, inv_deg, w_cat, b_all)

    middle_representations = [pre_all[li, :N, :hid_dims[li]] for li in range(L)]
    # Final activation + link head from the last pre (cheap, lane-dense wrapper ops).
    pre_last = pre_all[L - 1, :N, :hid_dims[-1]]
    x_final = jnp.where(pre_last >= 0, pre_last, 0.01 * pre_last)
    link_prediction = x_final @ params["w_link"] + params["b_link"]
    teta = jax.nn.sigmoid(params["raw_teta"])
    return x_final, middle_representations, link_prediction, teta


# ----------------------------------------------------------------------------
# Parameter init (matches nn.Linear-style uniform init)
# ----------------------------------------------------------------------------
def init_params(key, in_channels, hid_channels_list, teta_init=0.5):
    params = {"layers": [], "raw_teta": jnp.float32(teta_init)}
    fin = in_channels
    for hid in hid_channels_list:
        key, k1, k2, k3 = jax.random.split(key, 4)
        scale = 1.0 / jnp.sqrt(jnp.float32(fin))
        w_rel = jax.random.uniform(k1, (fin, hid), jnp.float32, -scale, scale)
        b_rel = jax.random.uniform(k2, (1, hid), jnp.float32, -scale, scale)
        w_root = jax.random.uniform(k3, (fin, hid), jnp.float32, -scale, scale)
        params["layers"].append((w_rel, b_rel, w_root))
        fin = hid
    key, k1, k2 = jax.random.split(key, 3)
    scale = 1.0 / jnp.sqrt(jnp.float32(fin))
    params["w_link"] = jax.random.uniform(k1, (fin, 1), jnp.float32, -scale, scale)
    params["b_link"] = jax.random.uniform(k2, (1, 1), jnp.float32, -scale, scale)
    return params


# ----------------------------------------------------------------------------
# Pure-JAX references
# ----------------------------------------------------------------------------
def student_forward_ref_bf16(X, Adj, params):
    """Mirrors the kernel's bf16-input / f32-accumulate math (tight check)."""
    inv_deg = 1.0 / jnp.maximum(jnp.sum(Adj, axis=-1, keepdims=True), 1.0)
    adj = Adj.astype(jnp.bfloat16)
    x = jnp.where(jnp.isnan(X), 0.0, X).astype(jnp.bfloat16)
    mids, act = [], None
    for (w_rel, b_rel, w_root) in params["layers"]:
        agg = jnp.dot(adj, x, preferred_element_type=jnp.float32) * inv_deg
        w_cat = jnp.concatenate([w_rel, w_root], axis=0).astype(jnp.bfloat16)
        cat = jnp.concatenate([agg.astype(jnp.bfloat16), x], axis=-1)
        pre = jnp.dot(cat, w_cat, preferred_element_type=jnp.float32) + b_rel
        mids.append(pre)
        act = jnp.where(pre >= 0, pre, 0.01 * pre)
        x = act.astype(jnp.bfloat16)
    link = act @ params["w_link"] + params["b_link"]
    return act, mids, link, jax.nn.sigmoid(params["raw_teta"])


def student_forward_ref_f32(X, Adj, params):
    """Full-f32 module semantics (loose check against bf16 MXU inputs)."""
    x = jnp.where(jnp.isnan(X), 0.0, X)
    mids = []
    for w_rel, b_rel, w_root in params["layers"]:
        agg = (Adj @ x) / jnp.maximum(jnp.sum(Adj, axis=-1, keepdims=True), 1.0)
        pre = agg @ w_rel + b_rel + x @ w_root
        mids.append(pre)
        x = jnp.where(pre >= 0, pre, 0.01 * pre)
    link = x @ params["w_link"] + params["b_link"]
    return x, mids, link, jax.nn.sigmoid(params["raw_teta"])


# ----------------------------------------------------------------------------
if __name__ == "__main__":
    key = jax.random.PRNGKey(0)

    def run_case(key, N, in_ch, hid, fwd_kwargs):
        key, kx, ka, kp = jax.random.split(key, 4)
        X = jax.random.normal(kx, (N, in_ch), jnp.float32)
        X = X.at[0, 0].set(jnp.nan)                  # exercise the isnan -> 0 path
        A = (jax.random.uniform(ka, (N, N)) < 0.3).astype(jnp.float32)
        Adj = jnp.maximum(A, A.T)                    # symmetric dense 0/1 adjacency
        params = init_params(kp, in_ch, hid)

        fwd = jax.jit(functools.partial(student_forward, **fwd_kwargs))
        out_x, middles, link, teta = fwd(X, Adj, params)
        jax.block_until_ready((out_x, middles, link, teta))

        # Tight check vs a reference mirroring the kernel's mixed precision.
        rx, rm, rl, rt = student_forward_ref_bf16(X, Adj, params)
        assert out_x.shape == (N, hid[-1]) and link.shape == (N, 1)
        assert jnp.allclose(out_x, rx, atol=1e-2, rtol=1e-2)
        for m, r in zip(middles, rm):
            assert jnp.allclose(m, r, atol=1e-2, rtol=1e-2)
        assert jnp.allclose(link, rl, atol=1e-2, rtol=1e-2)
        assert jnp.allclose(teta, rt)

        # Loose check vs the full-f32 module semantics (bf16 MXU rounding expected).
        fx, fm, fl, ft = student_forward_ref_f32(X, Adj, params)
        assert jnp.allclose(out_x, fx, atol=1e-1, rtol=1e-1)
        assert jnp.allclose(link, fl, atol=1e-1, rtol=1e-1)
        assert not jnp.any(jnp.isnan(out_x))
        return key

    # Small graph: Adj-resident, single row tile.
    key = run_case(key, 16, 8, [32, 32, 32], {})
    # Multi-row-tile path (n_pad=640 -> tm=128, 5 tiles): resident and streamed variants.
    key = run_case(key, 600, 12, [48, 64], {})
    key = run_case(key, 600, 12, [48, 64], {"force_streamed": True})

    print("KERNEL_OK")
</pallas_src>

<mosaic_0001>
module attributes {stable_mosaic.version = 11 : i64} {
  func.func @_student_fused_kernel(%arg0: i32, %arg1: i32, %arg2: memref<128x128xbf16, #tpu.memory_space<any>>, %arg3: memref<128x128xi8, #tpu.memory_space<any>>, %arg4: memref<128x1xf32, #tpu.memory_space<vmem>>, %arg5: memref<1x256x128xbf16, #tpu.memory_space<vmem>>, %arg6: memref<1x1x128xf32, #tpu.memory_space<vmem>>, %arg7: memref<1x128x128xf32, #tpu.memory_space<vmem>>, %arg8: memref<128x128xbf16, #tpu.memory_space<vmem>>, %arg9: memref<128x128xbf16, #tpu.memory_space<vmem>>, %arg10: memref<2x!tpu.dma_semaphore, #tpu.memory_space<semaphore_mem>>, %arg11: memref<128x128xi8, #tpu.memory_space<vmem>>) attributes {dimension_semantics = [#tpu.dimension_semantics<arbitrary>, #tpu.dimension_semantics<arbitrary>], iteration_bounds = array<i64: 3, 1>, scalar_prefetch = 0 : i64, scratch_operands = 4 : i64, tpu.core_type = #tpu.core_type<tc>, window_params = [{}, {}, {transform_indices = @transform_2, window_bounds = array<i64: 128, 1>}, {transform_indices = @transform_3, window_bounds = array<i64: 1, 256, 128>}, {transform_indices = @transform_4, window_bounds = array<i64: 1, 1, 128>}, {transform_indices = @transform_5, window_bounds = array<i64: 1, 128, 128>}]} {
    %c0_i32 = arith.constant 0 : i32
    %0 = arith.cmpi eq, %arg0, %c0_i32 : i32
    %c0_i32_0 = arith.constant 0 : i32
    %1 = arith.cmpi eq, %arg1, %c0_i32_0 : i32
    %2 = arith.andi %0, %1 : i1
    %3 = arith.extui %2 : i1 to i32
    %c0_i32_1 = arith.constant 0 : i32
    %4 = arith.cmpi ne, %3, %c0_i32_1 : i32
    scf.if %4 {
      %c0_i32_16 = arith.constant 0 : i32
      %33 = tpu.memref_slice %arg10[%c0_i32_16] : memref<2x!tpu.dma_semaphore, #tpu.memory_space<semaphore_mem>> -> memref<1x!tpu.dma_semaphore, #tpu.memory_space<semaphore_mem>>
      %34 = tpu.memref_squeeze %33 : memref<1x!tpu.dma_semaphore, #tpu.memory_space<semaphore_mem>> -> memref<!tpu.dma_semaphore, #tpu.memory_space<semaphore_mem>>
      tpu.enqueue_dma source(%arg2 : memref<128x128xbf16, #tpu.memory_space<any>>) target(%arg8 : memref<128x128xbf16, #tpu.memory_space<vmem>>) target_semaphore(%34 : memref<!tpu.dma_semaphore, #tpu.memory_space<semaphore_mem>>)
      %c1_i32_17 = arith.constant 1 : i32
      %35 = tpu.memref_slice %arg10[%c1_i32_17] : memref<2x!tpu.dma_semaphore, #tpu.memory_space<semaphore_mem>> -> memref<1x!tpu.dma_semaphore, #tpu.memory_space<semaphore_mem>>
      %36 = tpu.memref_squeeze %35 : memref<1x!tpu.dma_semaphore, #tpu.memory_space<semaphore_mem>> -> memref<!tpu.dma_semaphore, #tpu.memory_space<semaphore_mem>>
      tpu.enqueue_dma source(%arg3 : memref<128x128xi8, #tpu.memory_space<any>>) target(%arg11 : memref<128x128xi8, #tpu.memory_space<vmem>>) target_semaphore(%36 : memref<!tpu.dma_semaphore, #tpu.memory_space<semaphore_mem>>)
      %c1_i32_18 = arith.constant 1 : i32
      %37 = tpu.memref_slice %arg10[%c1_i32_18] : memref<2x!tpu.dma_semaphore, #tpu.memory_space<semaphore_mem>> -> memref<1x!tpu.dma_semaphore, #tpu.memory_space<semaphore_mem>>
      %38 = tpu.memref_squeeze %37 : memref<1x!tpu.dma_semaphore, #tpu.memory_space<semaphore_mem>> -> memref<!tpu.dma_semaphore, #tpu.memory_space<semaphore_mem>>
      tpu.wait_dma2 semaphore(%38 : memref<!tpu.dma_semaphore, #tpu.memory_space<semaphore_mem>>) src(%arg3 : memref<128x128xi8, #tpu.memory_space<any>>) dst(%arg11 : memref<128x128xi8, #tpu.memory_space<vmem>>)
      %c0_i32_19 = arith.constant 0 : i32
      %39 = tpu.memref_slice %arg10[%c0_i32_19] : memref<2x!tpu.dma_semaphore, #tpu.memory_space<semaphore_mem>> -> memref<1x!tpu.dma_semaphore, #tpu.memory_space<semaphore_mem>>
      %40 = tpu.memref_squeeze %39 : memref<1x!tpu.dma_semaphore, #tpu.memory_space<semaphore_mem>> -> memref<!tpu.dma_semaphore, #tpu.memory_space<semaphore_mem>>
      tpu.wait_dma2 semaphore(%40 : memref<!tpu.dma_semaphore, #tpu.memory_space<semaphore_mem>>) src(%arg2 : memref<128x128xbf16, #tpu.memory_space<any>>) dst(%arg8 : memref<128x128xbf16, #tpu.memory_space<vmem>>)
      %c0 = arith.constant 0 : index
      %c0_20 = arith.constant 0 : index
      %41 = vector.load %arg8[%c0, %c0_20] : memref<128x128xbf16, #tpu.memory_space<vmem>>, vector<128x128xbf16>
      %42 = arith.cmpf one, %41, %41 : vector<128x128xbf16>
      %cst = arith.constant 0.000000e+00 : bf16
      %43 = vector.broadcast %cst : bf16 to vector<128x128xbf16>
      %44 = arith.select %42, %43, %41 : vector<128x128xi1>, vector<128x128xbf16>
      %c0_21 = arith.constant 0 : index
      %c0_22 = arith.constant 0 : index
      %45 = vector.load %arg8[%c0_21, %c0_22] : memref<128x128xbf16, #tpu.memory_space<vmem>>, vector<128x128xbf16>
      tpu.vector_store %arg8[%c0_21, %c0_22], %44 {strides = array<i32>} : memref<128x128xbf16, #tpu.memory_space<vmem>>, vector<128x128xbf16>,
    } else {
    }
    %c128_i32 = arith.constant 128 : i32
    %5 = arith.muli %arg1, %c128_i32 : i32
    %6 = tpu.assume_multiple %5, 128 : i32
    %c2_i32 = arith.constant 2 : i32
    %c0_i32_2 = arith.constant 0 : i32
    %7 = arith.cmpi eq, %c2_i32, %c0_i32_2 : i32
    %c1_i32 = arith.constant 1 : i32
    %8 = arith.select %7, %c1_i32, %c2_i32 : i32
    %9 = arith.remsi %arg0, %8 : i32
    %c0_i32_3 = arith.constant 0 : i32
    %10 = arith.cmpi ne, %9, %c0_i32_3 : i32
    %c0_i32_4 = arith.constant 0 : i32
    %11 = arith.cmpi slt, %9, %c0_i32_4 : i32
    %c0_i32_5 = arith.constant 0 : i32
    %12 = arith.cmpi slt, %8, %c0_i32_5 : i32
    %13 = arith.xori %11, %12 : i1
    %14 = arith.andi %13, %10 : i1
    %15 = arith.addi %9, %8 : i32
    %16 = arith.select %14, %15, %9 : i32
    %c0_i32_6 = arith.constant 0 : i32
    %17 = arith.cmpi eq, %16, %c0_i32_6 : i32
    %18 = arith.extui %17 : i1 to i32
    %c0_i32_7 = arith.constant 0 : i32
    %19 = arith.cmpi ne, %18, %c0_i32_7 : i32
    scf.if %19 {
      %33 = arith.index_cast %6 : i32 to index
      %c0 = arith.constant 0 : index
      %34 = vector.load %arg11[%33, %c0] : memref<128x128xi8, #tpu.memory_space<vmem>>, vector<128x128xi8>
      %35 = arith.sitofp %34 : vector<128x128xi8> to vector<128x128xbf16>
      %c0_16 = arith.constant 0 : index
      %c0_17 = arith.constant 0 : index
      %36 = vector.load %arg8[%c0_16, %c0_17] : memref<128x128xbf16, #tpu.memory_space<vmem>>, vector<128x128xbf16>
      %cst = arith.constant dense<0.000000e+00> : vector<128x128xf32>
      %37 = tpu.matmul %35, %36, %cst {dimension_numbers = #tpu.dot_dimension_numbers<[1], [0], [0], [1], [0, 0, 1, 1], [], []>} : vector<128x128xbf16>, vector<128x128xbf16>, vector<128x128xf32> -> vector<128x128xf32>
      %c0_18 = arith.constant 0 : index
      %c0_19 = arith.constant 0 : index
      %38 = vector.load %arg4[%c0_18, %c0_19] : memref<128x1xf32, #tpu.memory_space<vmem>>, vector<128x1xf32>
      %39 = vector.broadcast %38 : vector<128x1xf32> to vector<128x128xf32>
      %40 = arith.mulf %37, %39 : vector<128x128xf32>
      %41 = arith.index_cast %6 : i32 to index
      %c0_20 = arith.constant 0 : index
      %42 = vector.load %arg8[%41, %c0_20] : memref<128x128xbf16, #tpu.memory_space<vmem>>, vector<128x128xbf16>
      %43 = arith.truncf %40 : vector<128x128xf32> to vector<128x128xbf16>
      %44 = tpu.concatenate %43, %42 in 1 : vector<128x128xbf16>, vector<128x128xbf16> -> vector<128x256xbf16>
      %c0_21 = arith.constant 0 : index
      %c0_22 = arith.constant 0 : index
      %c0_23 = arith.constant 0 : index
      %45 = vector.load %arg5[%c0_21, %c0_22, %c0_23] : memref<1x256x128xbf16, #tpu.memory_space<vmem>>, vector<1x256x128xbf16>
      %46 = vector.shape_cast %45 : vector<1x256x128xbf16> to vector<256x128xbf16>
      %cst_24 = arith.constant dense<0.000000e+00> : vector<128x128xf32>
      %47 = tpu.matmul %44, %46, %cst_24 {dimension_numbers = #tpu.dot_dimension_numbers<[1], [0], [0], [1], [0, 0, 1, 1], [], []>} : vector<128x256xbf16>, vector<256x128xbf16>, vector<128x128xf32> -> vector<128x128xf32>
      %c0_25 = arith.constant 0 : index
      %c0_26 = arith.constant 0 : index
      %c0_27 = arith.constant 0 : index
      %48 = vector.load %arg6[%c0_25, %c0_26, %c0_27] : memref<1x1x128xf32, #tpu.memory_space<vmem>>, vector<1x1x128xf32>
      %49 = vector.shape_cast %48 : vector<1x1x128xf32> to vector<1x128xf32>
      %50 = vector.broadcast %49 : vector<1x128xf32> to vector<128x128xf32>
      %51 = arith.addf %47, %50 : vector<128x128xf32>
      %c0_28 = arith.constant 0 : index
      %c0_29 = arith.constant 0 : index
      %c0_30 = arith.constant 0 : index
      %52 = vector.load %arg7[%c0_28, %c0_29, %c0_30] : memref<1x128x128xf32, #tpu.memory_space<vmem>>, vector<1x128x128xf32>
      %53 = vector.shape_cast %52 : vector<1x128x128xf32> to vector<128x128xf32>
      %54 = vector.shape_cast %51 : vector<128x128xf32> to vector<1x128x128xf32>
      tpu.vector_store %arg7[%c0_28, %c0_29, %c0_30], %54 {strides = array<i32>} : memref<1x128x128xf32, #tpu.memory_space<vmem>>, vector<1x128x128xf32>,
      %c2_i32_31 = arith.constant 2 : i32
      %55 = arith.cmpi slt, %arg0, %c2_i32_31 : i32
      %56 = arith.extui %55 : i1 to i32
      %c0_i32_32 = arith.constant 0 : i32
      %57 = arith.cmpi ne, %56, %c0_i32_32 : i32
      scf.if %57 {
        %cst_33 = arith.constant 0.000000e+00 : f32
        %58 = vector.broadcast %cst_33 : f32 to vector<128x128xf32>
        %59 = arith.cmpf oge, %51, %58 : vector<128x128xf32>
        %cst_34 = arith.constant 0.00999999977 : f32
        %60 = vector.broadcast %cst_34 : f32 to vector<128x128xf32>
        %61 = arith.mulf %60, %51 : vector<128x128xf32>
        %62 = arith.select %59, %51, %61 : vector<128x128xi1>, vector<128x128xf32>
        %63 = arith.truncf %62 : vector<128x128xf32> to vector<128x128xbf16>
        %64 = arith.index_cast %6 : i32 to index
        %c0_35 = arith.constant 0 : index
        %65 = vector.load %arg9[%64, %c0_35] : memref<128x128xbf16, #tpu.memory_space<vmem>>, vector<128x128xbf16>
        tpu.vector_store %arg9[%64, %c0_35], %63 {strides = array<i32>} : memref<128x128xbf16, #tpu.memory_space<vmem>>, vector<128x128xbf16>,
      } else {
      }
    } else {
    }
    %c2_i32_8 = arith.constant 2 : i32
    %c0_i32_9 = arith.constant 0 : i32
    %20 = arith.cmpi eq, %c2_i32_8, %c0_i32_9 : i32
    %c1_i32_10 = arith.constant 1 : i32
    %21 = arith.select %20, %c1_i32_10, %c2_i32_8 : i32
    %22 = arith.remsi %arg0, %21 : i32
    %c0_i32_11 = arith.constant 0 : i32
    %23 = arith.cmpi ne, %22, %c0_i32_11 : i32
    %c0_i32_12 = arith.constant 0 : i32
    %24 = arith.cmpi slt, %22, %c0_i32_12 : i32
    %c0_i32_13 = arith.constant 0 : i32
    %25 = arith.cmpi slt, %21, %c0_i32_13 : i32
    %26 = arith.xori %24, %25 : i1
    %27 = arith.andi %26, %23 : i1
    %28 = arith.addi %22, %21 : i32
    %29 = arith.select %27, %28, %22 : i32
    %c1_i32_14 = arith.constant 1 : i32
    %30 = arith.cmpi eq, %29, %c1_i32_14 : i32
    %31 = arith.extui %30 : i1 to i32
    %c0_i32_15 = arith.constant 0 : i32
    %32 = arith.cmpi ne, %31, %c0_i32_15 : i32
    scf.if %32 {
      %33 = arith.index_cast %6 : i32 to index
      %c0 = arith.constant 0 : index
      %34 = vector.load %arg11[%33, %c0] : memref<128x128xi8, #tpu.memory_space<vmem>>, vector<128x128xi8>
      %35 = arith.sitofp %34 : vector<128x128xi8> to vector<128x128xbf16>
      %c0_16 = arith.constant 0 : index
      %c0_17 = arith.constant 0 : index
      %36 = vector.load %arg9[%c0_16, %c0_17] : memref<128x128xbf16, #tpu.memory_space<vmem>>, vector<128x128xbf16>
      %cst = arith.constant dense<0.000000e+00> : vector<128x128xf32>
      %37 = tpu.matmul %35, %36, %cst {dimension_numbers = #tpu.dot_dimension_numbers<[1], [0], [0], [1], [0, 0, 1, 1], [], []>} : vector<128x128xbf16>, vector<128x128xbf16>, vector<128x128xf32> -> vector<128x128xf32>
      %c0_18 = arith.constant 0 : index
      %c0_19 = arith.constant 0 : index
      %38 = vector.load %arg4[%c0_18, %c0_19] : memref<128x1xf32, #tpu.memory_space<vmem>>, vector<128x1xf32>
      %39 = vector.broadcast %38 : vector<128x1xf32> to vector<128x128xf32>
      %40 = arith.mulf %37, %39 : vector<128x128xf32>
      %41 = arith.index_cast %6 : i32 to index
      %c0_20 = arith.constant 0 : index
      %42 = vector.load %arg9[%41, %c0_20] : memref<128x128xbf16, #tpu.memory_space<vmem>>, vector<128x128xbf16>
      %43 = arith.truncf %40 : vector<128x128xf32> to vector<128x128xbf16>
      %44 = tpu.concatenate %43, %42 in 1 : vector<128x128xbf16>, vector<128x128xbf16> -> vector<128x256xbf16>
      %c0_21 = arith.constant 0 : index
      %c0_22 = arith.constant 0 : index
      %c0_23 = arith.constant 0 : index
      %45 = vector.load %arg5[%c0_21, %c0_22, %c0_23] : memref<1x256x128xbf16, #tpu.memory_space<vmem>>, vector<1x256x128xbf16>
      %46 = vector.shape_cast %45 : vector<1x256x128xbf16> to vector<256x128xbf16>
      %cst_24 = arith.constant dense<0.000000e+00> : vector<128x128xf32>
      %47 = tpu.matmul %44, %46, %cst_24 {dimension_numbers = #tpu.dot_dimension_numbers<[1], [0], [0], [1], [0, 0, 1, 1], [], []>} : vector<128x256xbf16>, vector<256x128xbf16>, vector<128x128xf32> -> vector<128x128xf32>
      %c0_25 = arith.constant 0 : index
      %c0_26 = arith.constant 0 : index
      %c0_27 = arith.constant 0 : index
      %48 = vector.load %arg6[%c0_25, %c0_26, %c0_27] : memref<1x1x128xf32, #tpu.memory_space<vmem>>, vector<1x1x128xf32>
      %49 = vector.shape_cast %48 : vector<1x1x128xf32> to vector<1x128xf32>
      %50 = vector.broadcast %49 : vector<1x128xf32> to vector<128x128xf32>
      %51 = arith.addf %47, %50 : vector<128x128xf32>
      %c0_28 = arith.constant 0 : index
      %c0_29 = arith.constant 0 : index
      %c0_30 = arith.constant 0 : index
      %52 = vector.load %arg7[%c0_28, %c0_29, %c0_30] : memref<1x128x128xf32, #tpu.memory_space<vmem>>, vector<1x128x128xf32>
      %53 = vector.shape_cast %52 : vector<1x128x128xf32> to vector<128x128xf32>
      %54 = vector.shape_cast %51 : vector<128x128xf32> to vector<1x128x128xf32>
      tpu.vector_store %arg7[%c0_28, %c0_29, %c0_30], %54 {strides = array<i32>} : memref<1x128x128xf32, #tpu.memory_space<vmem>>, vector<1x128x128xf32>,
      %c2_i32_31 = arith.constant 2 : i32
      %55 = arith.cmpi slt, %arg0, %c2_i32_31 : i32
      %56 = arith.extui %55 : i1 to i32
      %c0_i32_32 = arith.constant 0 : i32
      %57 = arith.cmpi ne, %56, %c0_i32_32 : i32
      scf.if %57 {
        %cst_33 = arith.constant 0.000000e+00 : f32
        %58 = vector.broadcast %cst_33 : f32 to vector<128x128xf32>
        %59 = arith.cmpf oge, %51, %58 : vector<128x128xf32>
        %cst_34 = arith.constant 0.00999999977 : f32
        %60 = vector.broadcast %cst_34 : f32 to vector<128x128xf32>
        %61 = arith.mulf %60, %51 : vector<128x128xf32>
        %62 = arith.select %59, %51, %61 : vector<128x128xi1>, vector<128x128xf32>
        %63 = arith.truncf %62 : vector<128x128xf32> to vector<128x128xbf16>
        %64 = arith.index_cast %6 : i32 to index
        %c0_35 = arith.constant 0 : index
        %65 = vector.load %arg8[%64, %c0_35] : memref<128x128xbf16, #tpu.memory_space<vmem>>, vector<128x128xbf16>
        tpu.vector_store %arg8[%64, %c0_35], %63 {strides = array<i32>} : memref<128x128xbf16, #tpu.memory_space<vmem>>, vector<128x128xbf16>,
      } else {
      }
    } else {
    }
    return
  }
  func.func @transform_2(%arg0: i32, %arg1: i32) -> (i32, i32) {
    %c0_i32 = arith.constant 0 : i32
    %c0_i32_0 = arith.constant 0 : i32
    return %arg1, %c0_i32 : i32, i32
  }
  func.func @transform_3(%arg0: i32, %arg1: i32) -> (i32, i32, i32) {
    %c0_i32 = arith.constant 0 : i32
    %c0_i32_0 = arith.constant 0 : i32
    %c0_i32_1 = arith.constant 0 : i32
    return %arg0, %c0_i32, %c0_i32_0 : i32, i32, i32
  }
  func.func @transform_4(%arg0: i32, %arg1: i32) -> (i32, i32, i32) {
    %c0_i32 = arith.constant 0 : i32
    %c0_i32_0 = arith.constant 0 : i32
    %c0_i32_1 = arith.constant 0 : i32
    return %arg0, %c0_i32, %c0_i32_0 : i32, i32, i32
  }
  func.func @transform_5(%arg0: i32, %arg1: i32) -> (i32, i32, i32) {
    %c0_i32 = arith.constant 0 : i32
    %c0_i32_0 = arith.constant 0 : i32
    return %arg0, %arg1, %c0_i32 : i32, i32, i32
  }
}

</mosaic_0001>

<llo_original>
// kernel: student_forward.1
$region0: #{student_forward.1}
  #allocation0 [shape = 'u32[]', space=smem, size = 0x4, offset = 0x4, fixed_abs, tag = 'smem constant byte address 0x4 - core index']
  #allocation1 [shape = 'u32[144,128]{1,0:T(1,128)}', space=vmem, size = 0x12000, scoped, tag = 'internal scratch']
  #allocation2 [shape = 'bf16[128,128]{1,0:T(8,128)(2,1)}', space=vmem, size = 0x8000, scoped, tag = 'scratch operand']
  #allocation3 [shape = 'bf16[128,128]{1,0:T(8,128)(2,1)}', space=vmem, size = 0x8000, scoped, tag = 'scratch operand']
  #allocation4 [shape = 's32[2]{0}', space=sflag, size = 0x8, scoped, tag = 'scratch operand']
  #allocation5 [shape = 's8[128,128]{1,0:T(32,128)(4,1)}', space=vmem, size = 0x4000, scoped, tag = 'scratch operand']
  #allocation6 [shape = 's32[]', space=sflag, size = 0x4, offset = 0, fixed_abs, tag = 'sflag constant byte address 0x0 - dummy sync flag']
  #allocation7 [shape = 's32[]', space=sflag, size = 0x4, offset = 0, fixed_abs, tag = 'sflag constant byte address 0x0 - dummy sync flag']
  %s0 = inlined_call_operand.vmem [shape: bf16[128,128], index: 0, kind: input, shape index: {}]
  %s1 = inlined_call_operand.vmem [shape: s8[128,128], index: 1, kind: input, shape index: {}]
  %s2 = inlined_call_operand.vmem [shape: f32[128,1], index: 2, kind: input, shape index: {}]
  %s3 = inlined_call_operand.vmem [shape: bf16[3,256,128], index: 3, kind: input, shape index: {}]
  %s4 = inlined_call_operand.vmem [shape: f32[3,1,128], index: 4, kind: input, shape index: {}]
  %s5 = inlined_call_operand.vmem [shape: f32[3,128,128], index: 5, kind: output, shape index: {}]
  %s6 = sld [smem:[#allocation0]]
  $region133: #{student_forward.1} parent=0
    _
  %s8 = ssub.s32 1, %s6
  %s9 = scalar_select 0, %s8, %s6
  loop: start=0, step=1, limit=5
  $region2: #{student_forward.1} parent=0 // loop_pre_header
    _
  $region3: #{student_forward.1} parent=0 // loop_header
    %s11 = sphi 0, %s15
    %p12 = scmp.ge.s32.totalorder %s11, 5
    %s18 = sphi 0, %s30
    %s19 = sphi 0, %s26
    %s20 = sphi 0, %s18
    %s21 = sphi 0, %s19
    %s22 = sphi 0, %s20
    %s23 = sphi 0, %s21
    %s33 = sphi 0, %s35
    %s36 = sphi 0, %s33
    %s37 = sphi 0, %s36
    %s53 = sphi 0, %s37
    %s59 = sphi 0, %s61
    %s62 = sphi 0, %s59
    %s63 = sphi 0, %s62
    %s79 = sphi 0, %s63
    %s85 = sphi 0, %s87
    %s88 = sphi 0, %s85
    %s89 = sphi 0, %s88
    %s105 = sphi 0, %s89
    %s113 = sphi 0, %s115
    %s116 = sphi 0, %s113
    %s117 = sphi 0, %s116
    %s133 = sphi 0, %s117
  $region4: #{student_forward.1} parent=0 // loop_header_branch
    %14 = sbr.rel (%p12) target = $region8
  $region5: #{student_forward.1} parent=0 // loop_body
    %s16 = ssub.s32 %s11, 1
    %s17 = ssub.s32 %s11, 2
    %s24 = sadd.s32 1, %s19
    %p25 = scmp.ge.s32.totalorder %s24, 1
    %s26 = scalar_select %p25, 0, %s24
    %s27 = sadd.s32 1, %s18
    %s28 = scalar_select %p25, %s27, %s18
    %p29 = scmp.ge.s32.totalorder %s28, 3
    %s30 = scalar_select %p29, 0, %s28
    %s31 = ssub.s32 %s19, %s26
    %p32 = scmp.eq.s32.totalorder %s31, 0
    %s34 = sadd.s32 %s33, 1
    %s35 = scalar_select %p32, %s33, %s34
    %p38 = pneg %p32
    %p39 = scmp.eq.s32.totalorder %s11, 2
    %p40 = por %p38, %p39
    %p41 = scmp.ne.s32.totalorder %s33, %s36
    %p42 = scmp.eq.s32.totalorder %s11, 0
    %p43 = por %p41, %p42
    %p44 = scmp.ne.s32.totalorder %s33, %s36
    %p45 = scmp.eq.s32.totalorder %s16, 2
    %p46 = por %p44, %p45
    %p47 = scmp.ne.s32.totalorder %s36, %s37
    %p48 = scmp.eq.s32.totalorder %s16, 0
    %p49 = por %p47, %p48
    %p50 = scmp.ne.s32.totalorder %s36, %s37
    %p51 = scmp.eq.s32.totalorder %s17, 2
    %p52 = por %p50, %p51
    %p54 = scmp.ne.s32.totalorder %s37, %s53
    %p55 = scmp.eq.s32.totalorder %s17, 0
    %p56 = por %p54, %p55
    %s57 = ssub.s32 %s18, %s30
    %p58 = scmp.eq.s32.totalorder %s57, 0
    %s60 = sadd.s32 %s59, 1
    %s61 = scalar_select %p58, %s59, %s60
    %p64 = pneg %p58
    %p65 = scmp.eq.s32.totalorder %s11, 2
    %p66 = por %p64, %p65
    %p67 = scmp.ne.s32.totalorder %s59, %s62
    %p68 = scmp.eq.s32.totalorder %s11, 0
    %p69 = por %p67, %p68
    %p70 = scmp.ne.s32.totalorder %s59, %s62
    %p71 = scmp.eq.s32.totalorder %s16, 2
    %p72 = por %p70, %p71
    %p73 = scmp.ne.s32.totalorder %s62, %s63
    %p74 = scmp.eq.s32.totalorder %s16, 0
    %p75 = por %p73, %p74
    %p76 = scmp.ne.s32.totalorder %s62, %s63
    %p77 = scmp.eq.s32.totalorder %s17, 2
    %p78 = por %p76, %p77
    %p80 = scmp.ne.s32.totalorder %s63, %s79
    %p81 = scmp.eq.s32.totalorder %s17, 0
    %p82 = por %p80, %p81
    %s83 = ssub.s32 %s18, %s30
    %p84 = scmp.eq.s32.totalorder %s83, 0
    %s86 = sadd.s32 %s85, 1
    %s87 = scalar_select %p84, %s85, %s86
    %p90 = pneg %p84
    %p91 = scmp.eq.s32.totalorder %s11, 2
    %p92 = por %p90, %p91
    %p93 = scmp.ne.s32.totalorder %s85, %s88
    %p94 = scmp.eq.s32.totalorder %s11, 0
    %p95 = por %p93, %p94
    %p96 = scmp.ne.s32.totalorder %s85, %s88
    %p97 = scmp.eq.s32.totalorder %s16, 2
    %p98 = por %p96, %p97
    %p99 = scmp.ne.s32.totalorder %s88, %s89
    %p100 = scmp.eq.s32.totalorder %s16, 0
    %p101 = por %p99, %p100
    %p102 = scmp.ne.s32.totalorder %s88, %s89
    %p103 = scmp.eq.s32.totalorder %s17, 2
    %p104 = por %p102, %p103
    %p106 = scmp.ne.s32.totalorder %s89, %s105
    %p107 = scmp.eq.s32.totalorder %s17, 0
    %p108 = por %p106, %p107
    %s109 = ssub.s32 %s18, %s30
    %s110 = ssub.s32 %s19, %s26
    %s111 = sor.u32 %s109, %s110
    %p112 = scmp.eq.s32.totalorder %s111, 0
    %s114 = sadd.s32 %s113, 1
    %s115 = scalar_select %p112, %s113, %s114
    %p118 = pneg %p112
    %p119 = scmp.eq.s32.totalorder %s11, 2
    %p120 = por %p118, %p119
    %p121 = scmp.ne.s32.totalorder %s113, %s116
    %p122 = scmp.eq.s32.totalorder %s11, 0
    %p123 = por %p121, %p122
    %p124 = scmp.ne.s32.totalorder %s113, %s116
    %p125 = scmp.eq.s32.totalorder %s16, 2
    %p126 = por %p124, %p125
    %p127 = scmp.ne.s32.totalorder %s116, %s117
    %p128 = scmp.eq.s32.totalorder %s16, 0
    %p129 = por %p127, %p128
    %p130 = scmp.ne.s32.totalorder %s116, %s117
    %p131 = scmp.eq.s32.totalorder %s17, 2
    %p132 = por %p130, %p131
    %p134 = scmp.ne.s32.totalorder %s117, %s133
    %p135 = scmp.eq.s32.totalorder %s17, 0
    %p136 = por %p134, %p135
    %p137 = scmp.le.s32.totalorder 1, %s11
    %p138 = scmp.lt.s32.totalorder %s11, 4
    %p139 = pnand %p137, %p138
    %p140 = pneg %p139
    // Predicated region
    $region9: #{student_forward.1} parent=5 // pred_check
      _
    $region10: #{student_forward.1} parent=5 // pred_check_branch
      %142 = sbr.rel (%p139) target = $region12
    $region11: #{student_forward.1} parent=5 // pred_region
      %s143 = ssub.s32 %s11, 1
      // Predicated region
      $region13: #{student_forward.1} parent=11 // pred_check
        %p144 = pneg %p49
      $region14: #{student_forward.1} parent=11 // pred_check_branch
        %146 = sbr.rel (%p144) target = $region16
      $region15: #{student_forward.1} parent=11 // pred_region
        %s147 = smul.u32 16, %s21
        %p148 = scmp.lt.s32.totalorder %s147, 15
        %s149 = scalar_select %p148, %s147, 15
        %s150 = smul.addr %s149, 8
        %s151 = scalar_lea.vmem %s2, %s150
        %s152 = smul.u32 16, %s21
      $region16: #{student_forward.1} parent=11 // pred_fallthru
        _
    $region12: #{student_forward.1} parent=5 // pred_fallthru
      _
    %p153 = scmp.lt.s32.totalorder %s11, 3
    // Predicated region
    $region17: #{student_forward.1} parent=5 // pred_check
      %p154 = pneg %p153
    $region18: #{student_forward.1} parent=5 // pred_check_branch
      %156 = sbr.rel (%p154) target = $region20
    $region19: #{student_forward.1} parent=5 // pred_region
      // Predicated region
      $region21: #{student_forward.1} parent=19 // pred_check
        %p157 = pneg %p69
      $region22: #{student_forward.1} parent=19 // pred_check_branch
        %159 = sbr.rel (%p157) target = $region24
      $region23: #{student_forward.1} parent=19 // pred_region
        %p160 = scmp.lt.s32.totalorder %s18, 2
        %s161 = scalar_select %p160, %s18, 2
        %s162 = smul.addr %s161, 32
        %s163 = smul.addr %s162, 4
        %s164 = scalar_lea.vmem %s3, %s163
      $region24: #{student_forward.1} parent=19 // pred_fallthru
        _
      // Predicated region
      $region25: #{student_forward.1} parent=19 // pred_check
        %p165 = pneg %p95
      $region26: #{student_forward.1} parent=19 // pred_check_branch
        %167 = sbr.rel (%p165) target = $region28
      $region27: #{student_forward.1} parent=19 // pred_region
        %p168 = scmp.lt.s32.totalorder %s18, 2
        %s169 = scalar_select %p168, %s18, 2
        %s170 = scalar_lea.vmem %s4, %s169
      $region28: #{student_forward.1} parent=19 // pred_fallthru
        _
    $region20: #{student_forward.1} parent=5 // pred_fallthru
      _
    %p171 = scmp.le.s32.totalorder 1, %s11
    %p172 = scmp.lt.s32.totalorder %s11, 4
    %p173 = pnand %p171, %p172
    %p174 = pneg %p173
    // Predicated region
    $region29: #{student_forward.1} parent=5 // pred_check
      _
    $region30: #{student_forward.1} parent=5 // pred_check_branch
      %176 = sbr.rel (%p173) target = $region32
    $region31: #{student_forward.1} parent=5 // pred_region
      %s177 = ssub.s32 %s11, 1
      %s178 = smul.u32 16, %s21
      %p179 = scmp.lt.s32.totalorder %s178, 15
      %s180 = scalar_select %p179, %s178, 15
      %s181 = smul.addr %s180, 8
      %s182 = scalar_lea.vmem %s2, %s181
      %p183 = pneg %p49
      %p184 = pneg %p46
      %p185 = scmp.lt.s32.totalorder %s20, 2
      %s186 = scalar_select %p185, %s20, 2
      %s187 = smul.addr %s186, 32
      %s188 = smul.addr %s187, 4
      %s189 = scalar_lea.vmem %s3, %s188
      %p190 = pneg %p75
      %p191 = pneg %p72
      %p192 = scmp.lt.s32.totalorder %s20, 2
      %s193 = scalar_select %p192, %s20, 2
      %s194 = scalar_lea.vmem %s4, %s193
      %p195 = pneg %p101
      %p196 = pneg %p98
      %p197 = pneg %p129
      %p198 = pneg %p126
      %s199 = smul.u32 16, %s21
      %p200 = scmp.lt.s32.totalorder %s20, 2
      %s201 = scalar_select %p200, %s20, 2
      %p202 = scmp.lt.s32.totalorder %s199, 15
      %s203 = scalar_select %p202, %s199, 15
      %s204 = smul.addr %s201, 16
      %s205 = sadd.s32 %s203, %s204
      %s206 = smul.addr %s205, 8
      %s207 = scalar_lea.vmem %s5, %s206
      %s208 = smul.u32 16, %s21
      %p209 = scmp.lt.s32.totalorder %s208, 15
      %s210 = scalar_select %p209, %s208, 15
      %s211 = smul.addr %s210, 8
      %s212 = scalar_lea.vmem %s2, %s211
      %s213 = smul.u32 16, %s21
      %p214 = scmp.lt.s32.totalorder %s20, 2
      %s215 = scalar_select %p214, %s20, 2
      %s216 = smul.addr %s215, 32
      %s217 = smul.addr %s216, 4
      %s218 = scalar_lea.vmem %s3, %s217
      %p219 = scmp.lt.s32.totalorder %s20, 2
      %s220 = scalar_select %p219, %s20, 2
      %s221 = scalar_lea.vmem %s4, %s220
      %s222 = smul.u32 16, %s21
      %p223 = scmp.lt.s32.totalorder %s20, 2
      %s224 = scalar_select %p223, %s20, 2
      %p225 = scmp.lt.s32.totalorder %s222, 15
      %s226 = scalar_select %p225, %s222, 15
      %s227 = smul.addr %s224, 16
      %s228 = sadd.s32 %s226, %s227
      %s229 = smul.addr %s228, 8
      %s230 = scalar_lea.vmem %s5, %s229
      %s231 = smul.u32 16, %s21
      %p233 = scmp.eq.s32.totalorder %s20, 0
      %p234 = scmp.eq.s32.totalorder %s21, 0
      %p235 = pnand %p233, %p234
      %p236 = pneg %p235
      // Predicated region
      $region33: #{student_forward.1} parent=31 // pred_check
        _
      $region34: #{student_forward.1} parent=31 // pred_check_branch
        %238 = sbr.rel (%p235) target = $region36
      $region35: #{student_forward.1} parent=31 // pred_region
        %p240 = scmp.lt.u32.totalorder 64, 8
        %p241 = pneg %p240
        // Predicated region
        $region37: #{student_forward.1} parent=35 // pred_check
          _
        $region38: #{student_forward.1} parent=35 // pred_check_branch
          %243 = sbr.rel (%p240) target = $region40
        $region39: #{student_forward.1} parent=35 // pred_region
          %s259 = sand.u32 64, 7
          %p260 = scmp.eq.s32.totalorder %s259, 0
          // Predicated region
          $region52: #{student_forward.1} parent=39 // pred_check
            %p261 = pneg %p260
          $region53: #{student_forward.1} parent=39 // pred_check_branch
            %263 = sbr.rel (%p261) target = $region55
          $region54: #{student_forward.1} parent=39 // pred_region
            loop: start=0, step=1, limit=1
            $region56: #{student_forward.1} parent=54 // loop_pre_header
              _
            $region57: #{student_forward.1} parent=54 // loop_header
              %s265 = sphi 0, %s269
              %p266 = scmp.ge.s32.totalorder %s265, 1
              %s270 = sphi %s0, %s0
              %s271 = sphi [#allocation2], [#allocation2]
            $region58: #{student_forward.1} parent=54 // loop_header_branch
              %268 = sbr.rel (%p266) target = $region62
            $region59: #{student_forward.1} parent=54 // loop_body
              %v272 = vld [vmem:[%s270] sm:$0xff]
              %273 = vst [vmem:[%s271] sm:$0xff] %v272
              %v274 = vld [vmem:[%s270 + $0x8] sm:$0xff]
              %275 = vst [vmem:[%s271 + $0x8] sm:$0xff] %v274
              %v276 = vld [vmem:[%s270 + $0x10] sm:$0xff]
              %277 = vst [vmem:[%s271 + $0x10] sm:$0xff] %v276
              %v278 = vld [vmem:[%s270 + $0x18] sm:$0xff]
              %279 = vst [vmem:[%s271 + $0x18] sm:$0xff] %v278
              %v280 = vld [vmem:[%s270 + $0x20] sm:$0xff]
              %281 = vst [vmem:[%s271 + $0x20] sm:$0xff] %v280
              %v282 = vld [vmem:[%s270 + $0x28] sm:$0xff]
              %283 = vst [vmem:[%s271 + $0x28] sm:$0xff] %v282
              %v284 = vld [vmem:[%s270 + $0x30] sm:$0xff]
              %285 = vst [vmem:[%s271 + $0x30] sm:$0xff] %v284
              %v286 = vld [vmem:[%s270 + $0x38] sm:$0xff]
              %287 = vst [vmem:[%s271 + $0x38] sm:$0xff] %v286
            $region60: #{student_forward.1} parent=54 // loop_footer
              %s269 = sadd.s32 1, %s265
            $region61: #{student_forward.1} parent=54 // loop_footer_branch
              %264 = sbr.rel target = $region57
            $region62: #{student_forward.1} parent=54 // loop_exit
              _
          $region55: #{student_forward.1} parent=39 // pred_fallthru
            _
          %p288 = pneg %p260
          // Predicated region
          $region63: #{student_forward.1} parent=39 // pred_check
            _
          $region64: #{student_forward.1} parent=39 // pred_check_branch
            %290 = sbr.rel (%p260) target = $region66
          $region65: #{student_forward.1} parent=39 // pred_region
            %s291 = sand.u32 64, 7
          $region66: #{student_forward.1} parent=39 // pred_fallthru
            _
        $region40: #{student_forward.1} parent=35 // pred_fallthru
          _
        // Predicated region
        $region41: #{student_forward.1} parent=35 // pred_check
          %p244 = pneg %p240
        $region42: #{student_forward.1} parent=35 // pred_check_branch
          %246 = sbr.rel (%p244) target = $region44
        $region43: #{student_forward.1} parent=35 // pred_region
          %s247 = sshll.u32 1, 64
          %s248 = ssub.s32 %s247, 1
          loop: start=0, step=1, limit=1
          $region45: #{student_forward.1} parent=43 // loop_pre_header
            _
          $region46: #{student_forward.1} parent=43 // loop_header
            %s250 = sphi 0, %s254
            %p251 = scmp.ge.s32.totalorder %s250, 1
            %s255 = sphi %s0, %s0
            %s256 = sphi [#allocation2], [#allocation2]
          $region47: #{student_forward.1} parent=43 // loop_header_branch
            %253 = sbr.rel (%p251) target = $region51
          $region48: #{student_forward.1} parent=43 // loop_body
            %v257 = vld [vmem:[%s255] sm:%s248]
            %258 = vst [vmem:[%s256] sm:%s248] %v257
          $region49: #{student_forward.1} parent=43 // loop_footer
            %s254 = sadd.s32 1, %s250
          $region50: #{student_forward.1} parent=43 // loop_footer_branch
            %249 = sbr.rel target = $region46
          $region51: #{student_forward.1} parent=43 // loop_exit
            _
        $region44: #{student_forward.1} parent=35 // pred_fallthru
          _
        // Predicated region
        $region67: #{student_forward.1} parent=35 // pred_check
          _
        $region68: #{student_forward.1} parent=35 // pred_check_branch
          %294 = sbr.rel (0) target = $region70
        $region69: #{student_forward.1} parent=35 // pred_region
          %295 = vsyncadd [#allocation4], 1024
        $region70: #{student_forward.1} parent=35 // pred_fallthru
          _
        %s296 = scalar_lea.sflag [#allocation4], 1
        %p298 = scmp.lt.u32.totalorder 32, 8
        %p299 = pneg %p298
        // Predicated region
        $region71: #{student_forward.1} parent=35 // pred_check
          _
        $region72: #{student_forward.1} parent=35 // pred_check_branch
          %301 = sbr.rel (%p298) target = $region74
        $region73: #{student_forward.1} parent=35 // pred_region
          %s317 = sand.u32 32, 7
          %p318 = scmp.eq.s32.totalorder %s317, 0
          // Predicated region
          $region86: #{student_forward.1} parent=73 // pred_check
            %p319 = pneg %p318
          $region87: #{student_forward.1} parent=73 // pred_check_branch
            %321 = sbr.rel (%p319) target = $region89
          $region88: #{student_forward.1} parent=73 // pred_region
            loop: start=0, step=1, limit=1
            $region90: #{student_forward.1} parent=88 // loop_pre_header
              _
            $region91: #{student_forward.1} parent=88 // loop_header
              %s323 = sphi 0, %s327
              %p324 = scmp.ge.s32.totalorder %s323, 1
              %s328 = sphi %s1, %s1
              %s329 = sphi [#allocation5], [#allocation5]
            $region92: #{student_forward.1} parent=88 // loop_header_branch
              %326 = sbr.rel (%p324) target = $region96
            $region93: #{student_forward.1} parent=88 // loop_body
              %v330 = vld [vmem:[%s328] sm:$0xff]
              %331 = vst [vmem:[%s329] sm:$0xff] %v330
              %v332 = vld [vmem:[%s328 + $0x8] sm:$0xff]
              %333 = vst [vmem:[%s329 + $0x8] sm:$0xff] %v332
              %v334 = vld [vmem:[%s328 + $0x10] sm:$0xff]
              %335 = vst [vmem:[%s329 + $0x10] sm:$0xff] %v334
              %v336 = vld [vmem:[%s328 + $0x18] sm:$0xff]
              %337 = vst [vmem:[%s329 + $0x18] sm:$0xff] %v336
            $region94: #{student_forward.1} parent=88 // loop_footer
              %s327 = sadd.s32 1, %s323
            $region95: #{student_forward.1} parent=88 // loop_footer_branch
              %322 = sbr.rel target = $region91
            $region96: #{student_forward.1} parent=88 // loop_exit
              _
          $region89: #{student_forward.1} parent=73 // pred_fallthru
            _
          %p338 = pneg %p318
          // Predicated region
          $region97: #{student_forward.1} parent=73 // pred_check
            _
          $region98: #{student_forward.1} parent=73 // pred_check_branch
            %340 = sbr.rel (%p318) target = $region100
          $region99: #{student_forward.1} parent=73 // pred_region
            %s341 = sand.u32 32, 7
          $region100: #{student_forward.1} parent=73 // pred_fallthru
            _
        $region74: #{student_forward.1} parent=35 // pred_fallthru
          _
        // Predicated region
        $region75: #{student_forward.1} parent=35 // pred_check
          %p302 = pneg %p298
        $region76: #{student_forward.1} parent=35 // pred_check_branch
          %304 = sbr.rel (%p302) target = $region78
        $region77: #{student_forward.1} parent=35 // pred_region
          %s305 = sshll.u32 1, 32
          %s306 = ssub.s32 %s305, 1
          loop: start=0, step=1, limit=1
          $region79: #{student_forward.1} parent=77 // loop_pre_header
            _
          $region80: #{student_forward.1} parent=77 // loop_header
            %s308 = sphi 0, %s312
            %p309 = scmp.ge.s32.totalorder %s308, 1
            %s313 = sphi %s1, %s1
            %s314 = sphi [#allocation5], [#allocation5]
          $region81: #{student_forward.1} parent=77 // loop_header_branch
            %311 = sbr.rel (%p309) target = $region85
          $region82: #{student_forward.1} parent=77 // loop_body
            %v315 = vld [vmem:[%s313] sm:%s306]
            %316 = vst [vmem:[%s314] sm:%s306] %v315
          $region83: #{student_forward.1} parent=77 // loop_footer
            %s312 = sadd.s32 1, %s308
          $region84: #{student_forward.1} parent=77 // loop_footer_branch
            %307 = sbr.rel target = $region80
          $region85: #{student_forward.1} parent=77 // loop_exit
            _
        $region78: #{student_forward.1} parent=35 // pred_fallthru
          _
        // Predicated region
        $region101: #{student_forward.1} parent=35 // pred_check
          _
        $region102: #{student_forward.1} parent=35 // pred_check_branch
          %344 = sbr.rel (0) target = $region104
        $region103: #{student_forward.1} parent=35 // pred_region
          %345 = vsyncadd %s296, 512
        $region104: #{student_forward.1} parent=35 // pred_fallthru
          _
        %s346 = smul.u32 2, 16
        %s347 = smul.u32 %s346, 1
        %s348 = sshll.u32 %s347, 4
        %349 = dma.done %s296, %s348
        %s350 = smul.u32 4, 16
        %s351 = smul.u32 %s350, 1
        %s352 = sshll.u32 %s351, 4
        %353 = dma.done [#allocation4], %s352
        %v354 = vld [vmem:[#allocation2] sm:$0xf]
        %v355 = vld [vmem:[#allocation2 + $0x4] sm:$0xf]
        %v356 = vld [vmem:[#allocation2 + $0x8] sm:$0xf]
        %v357 = vld [vmem:[#allocation2 + $0xc] sm:$0xf]
        %v358 = vld [vmem:[#allocation2 + $0x10] sm:$0xf]
        %v359 = vld [vmem:[#allocation2 + $0x14] sm:$0xf]
        %v360 = vld [vmem:[#allocation2 + $0x18] sm:$0xf]
        %v361 = vld [vmem:[#allocation2 + $0x1c] sm:$0xf]
        %v362 = vld [vmem:[#allocation2 + $0x20] sm:$0xf]
        %v363 = vld [vmem:[#allocation2 + $0x24] sm:$0xf]
        %v364 = vld [vmem:[#allocation2 + $0x28] sm:$0xf]
        %v365 = vld [vmem:[#allocation2 + $0x2c] sm:$0xf]
        %v366 = vld [vmem:[#allocation2 + $0x30] sm:$0xf]
        %v367 = vld [vmem:[#allocation2 + $0x34] sm:$0xf]
        %v368 = vld [vmem:[#allocation2 + $0x38] sm:$0xf]
        %v369 = vld [vmem:[#allocation2 + $0x3c] sm:$0xf]
        %vm370 = vcmp.ne.bf16.partialorder %v354, %v354
        %vm371 = vcmp.ne.bf16.partialorder %v355, %v355
        %vm372 = vcmp.ne.bf16.partialorder %v356, %v356
        %vm373 = vcmp.ne.bf16.partialorder %v357, %v357
        %vm374 = vcmp.ne.bf16.partialorder %v358, %v358
        %vm375 = vcmp.ne.bf16.partialorder %v359, %v359
        %vm376 = vcmp.ne.bf16.partialorder %v360, %v360
        %vm377 = vcmp.ne.bf16.partialorder %v361, %v361
        %vm378 = vcmp.ne.bf16.partialorder %v362, %v362
        %vm379 = vcmp.ne.bf16.partialorder %v363, %v363
        %vm380 = vcmp.ne.bf16.partialorder %v364, %v364
        %vm381 = vcmp.ne.bf16.partialorder %v365, %v365
        %vm382 = vcmp.ne.bf16.partialorder %v366, %v366
        %vm383 = vcmp.ne.bf16.partialorder %v367, %v367
        %vm384 = vcmp.ne.bf16.partialorder %v368, %v368
        %vm385 = vcmp.ne.bf16.partialorder %v369, %v369
        %v386 = vsel %vm370, 0, %v354
        %v387 = vsel %vm371, 0, %v355
        %v388 = vsel %vm372, 0, %v356
        %v389 = vsel %vm373, 0, %v357
        %v390 = vsel %vm374, 0, %v358
        %v391 = vsel %vm375, 0, %v359
        %v392 = vsel %vm376, 0, %v360
        %v393 = vsel %vm377, 0, %v361
        %v394 = vsel %vm378, 0, %v362
        %v395 = vsel %vm379, 0, %v363
        %v396 = vsel %vm380, 0, %v364
        %v397 = vsel %vm381, 0, %v365
        %v398 = vsel %vm382, 0, %v366
        %v399 = vsel %vm383, 0, %v367
        %v400 = vsel %vm384, 0, %v368
        %v401 = vsel %vm385, 0, %v369
        %402 = vst [vmem:[#allocation2] sm:$0xf] %v386
        %403 = vst [vmem:[#allocation2 + $0x4] sm:$0xf] %v387
        %404 = vst [vmem:[#allocation2 + $0x8] sm:$0xf] %v388
        %405 = vst [vmem:[#allocation2 + $0xc] sm:$0xf] %v389
        %406 = vst [vmem:[#allocation2 + $0x10] sm:$0xf] %v390
        %407 = vst [vmem:[#allocation2 + $0x14] sm:$0xf] %v391
        %408 = vst [vmem:[#allocation2 + $0x18] sm:$0xf] %v392
        %409 = vst [vmem:[#allocation2 + $0x1c] sm:$0xf] %v393
        %410 = vst [vmem:[#allocation2 + $0x20] sm:$0xf] %v394
        %411 = vst [vmem:[#allocation2 + $0x24] sm:$0xf] %v395
        %412 = vst [vmem:[#allocation2 + $0x28] sm:$0xf] %v396
        %413 = vst [vmem:[#allocation2 + $0x2c] sm:$0xf] %v397
        %414 = vst [vmem:[#allocation2 + $0x30] sm:$0xf] %v398
        %415 = vst [vmem:[#allocation2 + $0x34] sm:$0xf] %v399
        %416 = vst [vmem:[#allocation2 + $0x38] sm:$0xf] %v400
        %417 = vst [vmem:[#allocation2 + $0x3c] sm:$0xf] %v401
      $region36: #{student_forward.1} parent=31 // pred_fallthru
        _
      %s418 = smul.u32 %s21, 128
      %p419 = scmp.lt.s32.totalorder %s20, 0
      %s420 = ssub.s32 0, %s20
      %s421 = scalar_select %p419, %s420, %s20
      %s422 = sand.u32 %s421, 1
      %s423 = ssub.s32 0, %s422
      %s424 = scalar_select %p419, %s423, %s422
      %p425 = scmp.ne.s32.totalorder %s424, 0
      %p426 = scmp.lt.s32.totalorder %s424, 0
      %p427 = pnand %p426, %p425
      %p428 = pneg %p427
      %s429 = sadd.s32 %s424, 2
      %s430 = scalar_select %p428, %s429, %s424
      %p431 = scmp.eq.s32.totalorder %s430, 0
      // Predicated region
      $region105: #{student_forward.1} parent=31 // pred_check
        %p432 = pneg %p431
      $region106: #{student_forward.1} parent=31 // pred_check_branch
        %434 = sbr.rel (%p432) target = $region108
      $region107: #{student_forward.1} parent=31 // pred_region
        %s435 = sshra.s32 %s418, 5
        %s436 = sand.u32 %s418, 31
        %s437 = smul.addr %s435, 8
        %s438 = scalar_lea.vmem [#allocation5], %s437
        %v439 = vld [vmem:[%s438] sm:$0xff]
        %v440 = vld [vmem:[%s438 + $0x8] sm:$0xff]
        %v441 = vld [vmem:[%s438 + $0x10] sm:$0xff]
        %v442 = vld [vmem:[%s438 + $0x18] sm:$0xff]
        %v443 = vunpack.c.l.s8.bf16 %v439
        %v444 = vunpack.c.h.s8.bf16 %v439
        %v445 = vunpack.c.l.s8.bf16 %v440
        %v446 = vunpack.c.h.s8.bf16 %v440
        %v447 = vunpack.c.l.s8.bf16 %v441
        %v448 = vunpack.c.h.s8.bf16 %v441
        %v449 = vunpack.c.l.s8.bf16 %v442
        %v450 = vunpack.c.h.s8.bf16 %v442
        %v451 = vld [vmem:[#allocation2] sm:$0xf]
        %v452 = vld [vmem:[#allocation2 + $0x4] sm:$0xf]
        %v453 = vld [vmem:[#allocation2 + $0x8] sm:$0xf]
        %v454 = vld [vmem:[#allocation2 + $0xc] sm:$0xf]
        %v455 = vld [vmem:[#allocation2 + $0x10] sm:$0xf]
        %v456 = vld [vmem:[#allocation2 + $0x14] sm:$0xf]
        %v457 = vld [vmem:[#allocation2 + $0x18] sm:$0xf]
        %v458 = vld [vmem:[#allocation2 + $0x1c] sm:$0xf]
        %v459 = vld [vmem:[#allocation2 + $0x20] sm:$0xf]
        %v460 = vld [vmem:[#allocation2 + $0x24] sm:$0xf]
        %v461 = vld [vmem:[#allocation2 + $0x28] sm:$0xf]
        %v462 = vld [vmem:[#allocation2 + $0x2c] sm:$0xf]
        %v463 = vld [vmem:[#allocation2 + $0x30] sm:$0xf]
        %v464 = vld [vmem:[#allocation2 + $0x34] sm:$0xf]
        %v465 = vld [vmem:[#allocation2 + $0x38] sm:$0xf]
        %v466 = vld [vmem:[#allocation2 + $0x3c] sm:$0xf]
        %v483 = vunpack.c.l.b16 %v451
        %v484 = vunpack.c.l.b16 %v452
        %v485 = vunpack.c.l.b16 %v453
        %v486 = vunpack.c.l.b16 %v454
        %v487 = vunpack.c.l.b16 %v455
        %v488 = vunpack.c.l.b16 %v456
        %v489 = vunpack.c.l.b16 %v457
        %v490 = vunpack.c.l.b16 %v458
        %v491 = vunpack.c.l.b16 %v459
        %v492 = vunpack.c.l.b16 %v460
        %v493 = vunpack.c.l.b16 %v461
        %v494 = vunpack.c.l.b16 %v462
        %v495 = vunpack.c.l.b16 %v463
        %v496 = vunpack.c.l.b16 %v464
        %v497 = vunpack.c.l.b16 %v465
        %v498 = vunpack.c.l.b16 %v466
        %v499 = vpack.c.b16 %v484, %v483
        %v500 = vpack.c.b16 %v486, %v485
        %v501 = vpack.c.b16 %v488, %v487
        %v502 = vpack.c.b16 %v490, %v489
        %v503 = vpack.c.b16 %v492, %v491
        %v504 = vpack.c.b16 %v494, %v493
        %v505 = vpack.c.b16 %v496, %v495
        %v506 = vpack.c.b16 %v498, %v497
        %515 = vmatprep.subr.bf16.mxu0 0
        %516 = vmatpush1.bf16.msra.mxu0 %v506
        %517 = vmatprep.subr.bf16.mxu0 0
        %518 = vmatpush1.bf16.msra.mxu0 %v505
        %519 = vmatprep.subr.bf16.mxu0 0
        %520 = vmatpush1.bf16.msra.mxu0 %v504
        %521 = vmatprep.subr.bf16.mxu0 0
        %522 = vmatpush1.bf16.msra.mxu0 %v503
        %523 = vmatprep.subr.bf16.mxu0 0
        %524 = vmatpush1.bf16.msra.mxu0 %v502
        %525 = vmatprep.subr.bf16.mxu0 0
        %526 = vmatpush1.bf16.msra.mxu0 %v501
        %527 = vmatprep.subr.bf16.mxu0 0
        %528 = vmatpush1.bf16.msra.mxu0 %v500
        %529 = vmatprep.subr.bf16.mxu0 0
        %530 = vmatpush1.bf16.msra.mxu0 %v499
        %531 = vmatprep.subr.bf16.mxu0 0
        %532 = vmatpush2.bf16.msra.mxu0 0
        %533 = vmatprep.subr.bf16.mxu0 0
        %534 = vmatpush2.bf16.msra.mxu0 0
        %535 = vmatprep.subr.bf16.mxu0 0
        %536 = vmatpush2.bf16.msra.mxu0 0
        %537 = vmatprep.subr.bf16.mxu0 0
        %538 = vmatpush2.bf16.msra.mxu0 0
        %539 = vmatprep.subr.bf16.mxu0 0
        %540 = vmatpush2.bf16.msra.mxu0 0
        %541 = vmatprep.subr.bf16.mxu0 0
        %542 = vmatpush2.bf16.msra.mxu0 0
        %543 = vmatprep.subr.bf16.mxu0 0
        %544 = vmatpush2.bf16.msra.mxu0 0
        %545 = vmatprep.subr.bf16.mxu0 0
        %546 = vmatpush2.bf16.msra.mxu0 0
        %547 = vmatprep.mubr.bf16.mxu0 0
        %548 = vmatmul.mubr.bf16.gmra.mxu0 %v443
        %v549 = vpop.f32.mrf.mxu0
        %v550 = vadd.f32 0.0, %v549
        %v551 = vpop.f32.mrf.mxu0
        %v552 = vpop.f32.mrf.mxu0
        %v553 = vadd.f32 0.0, %v552
        %v554 = vpop.f32.mrf.mxu0
        %555 = vmatprep.mubr.bf16.mxu0 0
        %556 = vmatmul.mubr.bf16.gmra.mxu0 %v444
        %v557 = vpop.f32.mrf.mxu0
        %v558 = vadd.f32 0.0, %v557
        %v559 = vpop.f32.mrf.mxu0
        %v560 = vpop.f32.mrf.mxu0
        %v561 = vadd.f32 0.0, %v560
        %v562 = vpop.f32.mrf.mxu0
        %563 = vmatprep.mubr.bf16.mxu0 0
        %564 = vmatmul.mubr.bf16.gmra.mxu0 %v445
        %v565 = vpop.f32.mrf.mxu0
        %v566 = vadd.f32 0.0, %v565
        %v567 = vpop.f32.mrf.mxu0
        %v568 = vpop.f32.mrf.mxu0
        %v569 = vadd.f32 0.0, %v568
        %v570 = vpop.f32.mrf.mxu0
        %571 = vmatprep.mubr.bf16.mxu0 0
        %572 = vmatmul.mubr.bf16.gmra.mxu0 %v446
        %v573 = vpop.f32.mrf.mxu0
        %v574 = vadd.f32 0.0, %v573
        %v575 = vpop.f32.mrf.mxu0
        %v576 = vpop.f32.mrf.mxu0
        %v577 = vadd.f32 0.0, %v576
        %v578 = vpop.f32.mrf.mxu0
        %579 = vmatprep.mubr.bf16.mxu0 0
        %580 = vmatmul.mubr.bf16.gmra.mxu0 %v447
        %v581 = vpop.f32.mrf.mxu0
        %v582 = vadd.f32 0.0, %v581
        %v583 = vpop.f32.mrf.mxu0
        %v584 = vpop.f32.mrf.mxu0
        %v585 = vadd.f32 0.0, %v584
        %v586 = vpop.f32.mrf.mxu0
        %587 = vmatprep.mubr.bf16.mxu0 0
        %588 = vmatmul.mubr.bf16.gmra.mxu0 %v448
        %v589 = vpop.f32.mrf.mxu0
        %v590 = vadd.f32 0.0, %v589
        %v591 = vpop.f32.mrf.mxu0
        %v592 = vpop.f32.mrf.mxu0
        %v593 = vadd.f32 0.0, %v592
        %v594 = vpop.f32.mrf.mxu0
        %595 = vmatprep.mubr.bf16.mxu0 0
        %596 = vmatmul.mubr.bf16.gmra.mxu0 %v449
        %v597 = vpop.f32.mrf.mxu0
        %v598 = vadd.f32 0.0, %v597
        %v599 = vpop.f32.mrf.mxu0
        %v600 = vpop.f32.mrf.mxu0
        %v601 = vadd.f32 0.0, %v600
        %v602 = vpop.f32.mrf.mxu0
        %603 = vmatprep.mubr.bf16.mxu0 0
        %604 = vmatmul.mubr.bf16.gmra.mxu0 %v450
        %v605 = vpop.f32.mrf.mxu0
        %v606 = vadd.f32 0.0, %v605
        %v607 = vpop.f32.mrf.mxu0
        %v608 = vpop.f32.mrf.mxu0
        %v609 = vadd.f32 0.0, %v608
        %v610 = vpop.f32.mrf.mxu0
        %611 = vdwg.mxu0
        %v612 = vld [vmem:[%s212] sm:$0xff]
        %v613 = vld [vmem:[%s212 + $0x8] sm:$0xff]
        %v614 = vld [vmem:[%s212 + $0x10] sm:$0xff]
        %v615 = vld [vmem:[%s212 + $0x18] sm:$0xff]
        %v616 = vld [vmem:[%s212 + $0x20] sm:$0xff]
        %v617 = vld [vmem:[%s212 + $0x28] sm:$0xff]
        %v618 = vld [vmem:[%s212 + $0x30] sm:$0xff]
        %v619 = vld [vmem:[%s212 + $0x38] sm:$0xff]
        %v620 = vld [vmem:[%s212 + $0x40] sm:$0xff]
        %v621 = vld [vmem:[%s212 + $0x48] sm:$0xff]
        %v622 = vld [vmem:[%s212 + $0x50] sm:$0xff]
        %v623 = vld [vmem:[%s212 + $0x58] sm:$0xff]
        %v624 = vld [vmem:[%s212 + $0x60] sm:$0xff]
        %v625 = vld [vmem:[%s212 + $0x68] sm:$0xff]
        %v626 = vld [vmem:[%s212 + $0x70] sm:$0xff]
        %v627 = vld [vmem:[%s212 + $0x78] sm:$0xff]
        %629 = vset.pattern.permute.xlu0 0
        %630 = vperm.xlu0 %629, %v612
        %v631 = vpop.permute.xlu0 %630
        %634 = vset.pattern.permute.xlu0 0
        %635 = vperm.xlu0 %634, %v613
        %v636 = vpop.permute.xlu0 %635
        %639 = vset.pattern.permute.xlu0 0
        %640 = vperm.xlu0 %639, %v614
        %v641 = vpop.permute.xlu0 %640
        %644 = vset.pattern.permute.xlu0 0
        %645 = vperm.xlu0 %644, %v615
        %v646 = vpop.permute.xlu0 %645
        %649 = vset.pattern.permute.xlu0 0
        %650 = vperm.xlu0 %649, %v616
        %v651 = vpop.permute.xlu0 %650
        %654 = vset.pattern.permute.xlu0 0
        %655 = vperm.xlu0 %654, %v617
        %v656 = vpop.permute.xlu0 %655
        %659 = vset.pattern.permute.xlu0 0
        %660 = vperm.xlu0 %659, %v618
        %v661 = vpop.permute.xlu0 %660
        %664 = vset.pattern.permute.xlu0 0
        %665 = vperm.xlu0 %664, %v619
        %v666 = vpop.permute.xlu0 %665
        %669 = vset.pattern.permute.xlu0 0
        %670 = vperm.xlu0 %669, %v620
        %v671 = vpop.permute.xlu0 %670
        %674 = vset.pattern.permute.xlu0 0
        %675 = vperm.xlu0 %674, %v621
        %v676 = vpop.permute.xlu0 %675
        %679 = vset.pattern.permute.xlu0 0
        %680 = vperm.xlu0 %679, %v622
        %v681 = vpop.permute.xlu0 %680
        %684 = vset.pattern.permute.xlu0 0
        %685 = vperm.xlu0 %684, %v623
        %v686 = vpop.permute.xlu0 %685
        %689 = vset.pattern.permute.xlu0 0
        %690 = vperm.xlu0 %689, %v624
        %v691 = vpop.permute.xlu0 %690
        %694 = vset.pattern.permute.xlu0 0
        %695 = vperm.xlu0 %694, %v625
        %v696 = vpop.permute.xlu0 %695
        %699 = vset.pattern.permute.xlu0 0
        %700 = vperm.xlu0 %699, %v626
        %v701 = vpop.permute.xlu0 %700
        %704 = vset.pattern.permute.xlu0 0
        %705 = vperm.xlu0 %704, %v627
        %v706 = vpop.permute.xlu0 %705
        %v708 = vmul.f32 %v550, %v631
        %v709 = vmul.f32 %v553, %v636
        %v710 = vmul.f32 %v558, %v641
        %v711 = vmul.f32 %v561, %v646
        %v712 = vmul.f32 %v566, %v651
        %v713 = vmul.f32 %v569, %v656
        %v714 = vmul.f32 %v574, %v661
        %v715 = vmul.f32 %v577, %v666
        %v716 = vmul.f32 %v582, %v671
        %v717 = vmul.f32 %v585, %v676
        %v718 = vmul.f32 %v590, %v681
        %v719 = vmul.f32 %v593, %v686
        %v720 = vmul.f32 %v598, %v691
        %v721 = vmul.f32 %v601, %v696
        %v722 = vmul.f32 %v606, %v701
        %v723 = vmul.f32 %v609, %v706
        %s724 = sshra.s32 %s418, 3
        %s725 = sand.u32 %s418, 7
        %s726 = smul.addr %s724, 4
        %s727 = scalar_lea.vmem [#allocation2], %s726
        %v728 = vld [vmem:[%s727] sm:$0xf]
        %v729 = vld [vmem:[%s727 + $0x4] sm:$0xf]
        %v730 = vld [vmem:[%s727 + $0x8] sm:$0xf]
        %v731 = vld [vmem:[%s727 + $0xc] sm:$0xf]
        %v732 = vld [vmem:[%s727 + $0x10] sm:$0xf]
        %v733 = vld [vmem:[%s727 + $0x14] sm:$0xf]
        %v734 = vld [vmem:[%s727 + $0x18] sm:$0xf]
        %v735 = vld [vmem:[%s727 + $0x1c] sm:$0xf]
        %v736 = vld [vmem:[%s727 + $0x20] sm:$0xf]
        %v737 = vld [vmem:[%s727 + $0x24] sm:$0xf]
        %v738 = vld [vmem:[%s727 + $0x28] sm:$0xf]
        %v739 = vld [vmem:[%s727 + $0x2c] sm:$0xf]
        %v740 = vld [vmem:[%s727 + $0x30] sm:$0xf]
        %v741 = vld [vmem:[%s727 + $0x34] sm:$0xf]
        %v742 = vld [vmem:[%s727 + $0x38] sm:$0xf]
        %v743 = vld [vmem:[%s727 + $0x3c] sm:$0xf]
        %v744 = vpack.c.bf16 %v709, %v708
        %v745 = vpack.c.bf16 %v711, %v710
        %v746 = vpack.c.bf16 %v713, %v712
        %v747 = vpack.c.bf16 %v715, %v714
        %v748 = vpack.c.bf16 %v717, %v716
        %v749 = vpack.c.bf16 %v719, %v718
        %v750 = vpack.c.bf16 %v721, %v720
        %v751 = vpack.c.bf16 %v723, %v722
        %v768 = vunpack.c.l.b16 %v728
        %v769 = vunpack.c.l.b16 %v729
        %v770 = vunpack.c.l.b16 %v730
        %v771 = vunpack.c.l.b16 %v731
        %v772 = vunpack.c.l.b16 %v732
        %v773 = vunpack.c.l.b16 %v733
        %v774 = vunpack.c.l.b16 %v734
        %v775 = vunpack.c.l.b16 %v735
        %v776 = vunpack.c.l.b16 %v736
        %v777 = vunpack.c.l.b16 %v737
        %v778 = vunpack.c.l.b16 %v738
        %v779 = vunpack.c.l.b16 %v739
        %v780 = vunpack.c.l.b16 %v740
        %v781 = vunpack.c.l.b16 %v741
        %v782 = vunpack.c.l.b16 %v742
        %v783 = vunpack.c.l.b16 %v743
        %v784 = vpack.c.b16 %v769, %v768
        %v785 = vpack.c.b16 %v771, %v770
        %v786 = vpack.c.b16 %v773, %v772
        %v787 = vpack.c.b16 %v775, %v774
        %v788 = vpack.c.b16 %v777, %v776
        %v789 = vpack.c.b16 %v779, %v778
        %v790 = vpack.c.b16 %v781, %v780
        %v791 = vpack.c.b16 %v783, %v782
        %v800 = vld [vmem:[%s218] sm:$0xf]
        %v801 = vld [vmem:[%s218 + $0x4] sm:$0xf]
        %v802 = vld [vmem:[%s218 + $0x8] sm:$0xf]
        %v803 = vld [vmem:[%s218 + $0xc] sm:$0xf]
        %v804 = vld [vmem:[%s218 + $0x10] sm:$0xf]
        %v805 = vld [vmem:[%s218 + $0x14] sm:$0xf]
        %v806 = vld [vmem:[%s218 + $0x18] sm:$0xf]
        %v807 = vld [vmem:[%s218 + $0x1c] sm:$0xf]
        %v808 = vld [vmem:[%s218 + $0x20] sm:$0xf]
        %v809 = vld [vmem:[%s218 + $0x24] sm:$0xf]
        %v810 = vld [vmem:[%s218 + $0x28] sm:$0xf]
        %v811 = vld [vmem:[%s218 + $0x2c] sm:$0xf]
        %v812 = vld [vmem:[%s218 + $0x30] sm:$0xf]
        %v813 = vld [vmem:[%s218 + $0x34] sm:$0xf]
        %v814 = vld [vmem:[%s218 + $0x38] sm:$0xf]
        %v815 = vld [vmem:[%s218 + $0x3c] sm:$0xf]
        %v816 = vld [vmem:[%s218 + $0x40] sm:$0xf]
        %v817 = vld [vmem:[%s218 + $0x44] sm:$0xf]
        %v818 = vld [vmem:[%s218 + $0x48] sm:$0xf]
        %v819 = vld [vmem:[%s218 + $0x4c] sm:$0xf]
        %v820 = vld [vmem:[%s218 + $0x50] sm:$0xf]
        %v821 = vld [vmem:[%s218 + $0x54] sm:$0xf]
        %v822 = vld [vmem:[%s218 + $0x58] sm:$0xf]
        %v823 = vld [vmem:[%s218 + $0x5c] sm:$0xf]
        %v824 = vld [vmem:[%s218 + $0x60] sm:$0xf]
        %v825 = vld [vmem:[%s218 + $0x64] sm:$0xf]
        %v826 = vld [vmem:[%s218 + $0x68] sm:$0xf]
        %v827 = vld [vmem:[%s218 + $0x6c] sm:$0xf]
        %v828 = vld [vmem:[%s218 + $0x70] sm:$0xf]
        %v829 = vld [vmem:[%s218 + $0x74] sm:$0xf]
        %v830 = vld [vmem:[%s218 + $0x78] sm:$0xf]
        %v831 = vld [vmem:[%s218 + $0x7c] sm:$0xf]
        %v832 = vld [vmem:[%s221] sm:$0x1]
        %v834 = vlaneseq
        %v835 = vshrl.u32 %v834, 7
        %v836 = vsub.s32 0, %v835
        %v837 = vrot.slane %v832, %v836
        %v871 = vunpack.c.l.b16 %v800
        %v872 = vunpack.c.l.b16 %v801
        %v873 = vunpack.c.l.b16 %v802
        %v874 = vunpack.c.l.b16 %v803
        %v875 = vunpack.c.l.b16 %v804
        %v876 = vunpack.c.l.b16 %v805
        %v877 = vunpack.c.l.b16 %v806
        %v878 = vunpack.c.l.b16 %v807
        %v879 = vunpack.c.l.b16 %v808
        %v880 = vunpack.c.l.b16 %v809
        %v881 = vunpack.c.l.b16 %v810
        %v882 = vunpack.c.l.b16 %v811
        %v883 = vunpack.c.l.b16 %v812
        %v884 = vunpack.c.l.b16 %v813
        %v885 = vunpack.c.l.b16 %v814
        %v886 = vunpack.c.l.b16 %v815
        %v887 = vunpack.c.l.b16 %v816
        %v888 = vunpack.c.l.b16 %v817
        %v889 = vunpack.c.l.b16 %v818
        %v890 = vunpack.c.l.b16 %v819
        %v891 = vunpack.c.l.b16 %v820
        %v892 = vunpack.c.l.b16 %v821
        %v893 = vunpack.c.l.b16 %v822
        %v894 = vunpack.c.l.b16 %v823
        %v895 = vunpack.c.l.b16 %v824
        %v896 = vunpack.c.l.b16 %v825
        %v897 = vunpack.c.l.b16 %v826
        %v898 = vunpack.c.l.b16 %v827
        %v899 = vunpack.c.l.b16 %v828
        %v900 = vunpack.c.l.b16 %v829
        %v901 = vunpack.c.l.b16 %v830
        %v902 = vunpack.c.l.b16 %v831
        %v903 = vpack.c.b16 %v872, %v871
        %v904 = vpack.c.b16 %v874, %v873
        %v905 = vpack.c.b16 %v876, %v875
        %v906 = vpack.c.b16 %v878, %v877
        %v907 = vpack.c.b16 %v880, %v879
        %v908 = vpack.c.b16 %v882, %v881
        %v909 = vpack.c.b16 %v884, %v883
        %v910 = vpack.c.b16 %v886, %v885
        %v911 = vpack.c.b16 %v888, %v887
        %v912 = vpack.c.b16 %v890, %v889
        %v913 = vpack.c.b16 %v892, %v891
        %v914 = vpack.c.b16 %v894, %v893
        %v915 = vpack.c.b16 %v896, %v895
        %v916 = vpack.c.b16 %v898, %v897
        %v917 = vpack.c.b16 %v900, %v899
        %v918 = vpack.c.b16 %v902, %v901
        %935 = vmatprep.subr.bf16.mxu0 0
        %936 = vmatpush1.bf16.msra.mxu0 %v910
        %937 = vmatprep.subr.bf16.mxu0 0
        %938 = vmatpush1.bf16.msra.mxu0 %v909
        %939 = vmatprep.subr.bf16.mxu0 0
        %940 = vmatpush1.bf16.msra.mxu0 %v908
        %941 = vmatprep.subr.bf16.mxu0 0
        %942 = vmatpush1.bf16.msra.mxu0 %v907
        %943 = vmatprep.subr.bf16.mxu0 0
        %944 = vmatpush1.bf16.msra.mxu0 %v906
        %945 = vmatprep.subr.bf16.mxu0 0
        %946 = vmatpush1.bf16.msra.mxu0 %v905
        %947 = vmatprep.subr.bf16.mxu0 0
        %948 = vmatpush1.bf16.msra.mxu0 %v904
        %949 = vmatprep.subr.bf16.mxu0 0
        %950 = vmatpush1.bf16.msra.mxu0 %v903
        %951 = vmatprep.subr.bf16.mxu0 0
        %952 = vmatpush2.bf16.msra.mxu0 %v918
        %953 = vmatprep.subr.bf16.mxu0 0
        %954 = vmatpush2.bf16.msra.mxu0 %v917
        %955 = vmatprep.subr.bf16.mxu0 0
        %956 = vmatpush2.bf16.msra.mxu0 %v916
        %957 = vmatprep.subr.bf16.mxu0 0
        %958 = vmatpush2.bf16.msra.mxu0 %v915
        %959 = vmatprep.subr.bf16.mxu0 0
        %960 = vmatpush2.bf16.msra.mxu0 %v914
        %961 = vmatprep.subr.bf16.mxu0 0
        %962 = vmatpush2.bf16.msra.mxu0 %v913
        %963 = vmatprep.subr.bf16.mxu0 0
        %964 = vmatpush2.bf16.msra.mxu0 %v912
        %965 = vmatprep.subr.bf16.mxu0 0
        %966 = vmatpush2.bf16.msra.mxu0 %v911
        %967 = vmatprep.mubr.bf16.mxu0 %v784
        %968 = vmatmul.mubr.bf16.gmra.mxu0 %v744
        %v969 = vpop.f32.mrf.mxu0
        %v970 = vadd.f32 %v837, %v969
        %v971 = vpop.f32.mrf.mxu0
        %v972 = vpop.f32.mrf.mxu0
        %v973 = vadd.f32 %v837, %v972
        %v974 = vpop.f32.mrf.mxu0
        %975 = vmatprep.mubr.bf16.mxu0 %v785
        %976 = vmatmul.mubr.bf16.gmra.mxu0 %v745
        %v977 = vpop.f32.mrf.mxu0
        %v978 = vadd.f32 %v837, %v977
        %v979 = vpop.f32.mrf.mxu0
        %v980 = vpop.f32.mrf.mxu0
        %v981 = vadd.f32 %v837, %v980
        %v982 = vpop.f32.mrf.mxu0
        %983 = vmatprep.mubr.bf16.mxu0 %v786
        %984 = vmatmul.mubr.bf16.gmra.mxu0 %v746
        %v985 = vpop.f32.mrf.mxu0
        %v986 = vadd.f32 %v837, %v985
        %v987 = vpop.f32.mrf.mxu0
        %v988 = vpop.f32.mrf.mxu0
        %v989 = vadd.f32 %v837, %v988
        %v990 = vpop.f32.mrf.mxu0
        %991 = vmatprep.mubr.bf16.mxu0 %v787
        %992 = vmatmul.mubr.bf16.gmra.mxu0 %v747
        %v993 = vpop.f32.mrf.mxu0
        %v994 = vadd.f32 %v837, %v993
        %v995 = vpop.f32.mrf.mxu0
        %v996 = vpop.f32.mrf.mxu0
        %v997 = vadd.f32 %v837, %v996
        %v998 = vpop.f32.mrf.mxu0
        %999 = vmatprep.mubr.bf16.mxu0 %v788
        %1000 = vmatmul.mubr.bf16.gmra.mxu0 %v748
        %v1001 = vpop.f32.mrf.mxu0
        %v1002 = vadd.f32 %v837, %v1001
        %v1003 = vpop.f32.mrf.mxu0
        %v1004 = vpop.f32.mrf.mxu0
        %v1005 = vadd.f32 %v837, %v1004
        %v1006 = vpop.f32.mrf.mxu0
        %1007 = vmatprep.mubr.bf16.mxu0 %v789
        %1008 = vmatmul.mubr.bf16.gmra.mxu0 %v749
        %v1009 = vpop.f32.mrf.mxu0
        %v1010 = vadd.f32 %v837, %v1009
        %v1011 = vpop.f32.mrf.mxu0
        %v1012 = vpop.f32.mrf.mxu0
        %v1013 = vadd.f32 %v837, %v1012
        %v1014 = vpop.f32.mrf.mxu0
        %1015 = vmatprep.mubr.bf16.mxu0 %v790
        %1016 = vmatmul.mubr.bf16.gmra.mxu0 %v750
        %v1017 = vpop.f32.mrf.mxu0
        %v1018 = vadd.f32 %v837, %v1017
        %v1019 = vpop.f32.mrf.mxu0
        %v1020 = vpop.f32.mrf.mxu0
        %v1021 = vadd.f32 %v837, %v1020
        %v1022 = vpop.f32.mrf.mxu0
        %1023 = vmatprep.mubr.bf16.mxu0 %v791
        %1024 = vmatmul.mubr.bf16.gmra.mxu0 %v751
        %v1025 = vpop.f32.mrf.mxu0
        %v1026 = vadd.f32 %v837, %v1025
        %v1027 = vpop.f32.mrf.mxu0
        %v1028 = vpop.f32.mrf.mxu0
        %v1029 = vadd.f32 %v837, %v1028
        %v1030 = vpop.f32.mrf.mxu0
        %1031 = vdwg.mxu0
        %1032 = vst [vmem:[%s230] sm:$0xff] %v970
        %1033 = vst [vmem:[%s230 + $0x8] sm:$0xff] %v973
        %1034 = vst [vmem:[%s230 + $0x10] sm:$0xff] %v978
        %1035 = vst [vmem:[%s230 + $0x18] sm:$0xff] %v981
        %1036 = vst [vmem:[%s230 + $0x20] sm:$0xff] %v986
        %1037 = vst [vmem:[%s230 + $0x28] sm:$0xff] %v989
        %1038 = vst [vmem:[%s230 + $0x30] sm:$0xff] %v994
        %1039 = vst [vmem:[%s230 + $0x38] sm:$0xff] %v997
        %1040 = vst [vmem:[%s230 + $0x40] sm:$0xff] %v1002
        %1041 = vst [vmem:[%s230 + $0x48] sm:$0xff] %v1005
        %1042 = vst [vmem:[%s230 + $0x50] sm:$0xff] %v1010
        %1043 = vst [vmem:[%s230 + $0x58] sm:$0xff] %v1013
        %1044 = vst [vmem:[%s230 + $0x60] sm:$0xff] %v1018
        %1045 = vst [vmem:[%s230 + $0x68] sm:$0xff] %v1021
        %1046 = vst [vmem:[%s230 + $0x70] sm:$0xff] %v1026
        %1047 = vst [vmem:[%s230 + $0x78] sm:$0xff] %v1029
        %p1048 = scmp.lt.s32.totalorder %s20, 2
        // Predicated region
        $region109: #{student_forward.1} parent=107 // pred_check
          %p1049 = pneg %p1048
        $region110: #{student_forward.1} parent=107 // pred_check_branch
          %1051 = sbr.rel (%p1049) target = $region112
        $region111: #{student_forward.1} parent=107 // pred_region
          %vm1052 = vcmp.ge.f32.partialorder %v970, 0.0
          %vm1053 = vcmp.ge.f32.partialorder %v973, 0.0
          %vm1054 = vcmp.ge.f32.partialorder %v978, 0.0
          %vm1055 = vcmp.ge.f32.partialorder %v981, 0.0
          %vm1056 = vcmp.ge.f32.partialorder %v986, 0.0
          %vm1057 = vcmp.ge.f32.partialorder %v989, 0.0
          %vm1058 = vcmp.ge.f32.partialorder %v994, 0.0
          %vm1059 = vcmp.ge.f32.partialorder %v997, 0.0
          %vm1060 = vcmp.ge.f32.partialorder %v1002, 0.0
          %vm1061 = vcmp.ge.f32.partialorder %v1005, 0.0
          %vm1062 = vcmp.ge.f32.partialorder %v1010, 0.0
          %vm1063 = vcmp.ge.f32.partialorder %v1013, 0.0
          %vm1064 = vcmp.ge.f32.partialorder %v1018, 0.0
          %vm1065 = vcmp.ge.f32.partialorder %v1021, 0.0
          %vm1066 = vcmp.ge.f32.partialorder %v1026, 0.0
          %vm1067 = vcmp.ge.f32.partialorder %v1029, 0.0
          %v1068 = vmul.f32 %v970, 0.01
          %v1069 = vmul.f32 %v973, 0.01
          %v1070 = vmul.f32 %v978, 0.01
          %v1071 = vmul.f32 %v981, 0.01
          %v1072 = vmul.f32 %v986, 0.01
          %v1073 = vmul.f32 %v989, 0.01
          %v1074 = vmul.f32 %v994, 0.01
          %v1075 = vmul.f32 %v997, 0.01
          %v1076 = vmul.f32 %v1002, 0.01
          %v1077 = vmul.f32 %v1005, 0.01
          %v1078 = vmul.f32 %v1010, 0.01
          %v1079 = vmul.f32 %v1013, 0.01
          %v1080 = vmul.f32 %v1018, 0.01
          %v1081 = vmul.f32 %v1021, 0.01
          %v1082 = vmul.f32 %v1026, 0.01
          %v1083 = vmul.f32 %v1029, 0.01
          %v1084 = vsel %vm1052, %v970, %v1068
          %v1085 = vsel %vm1053, %v973, %v1069
          %v1086 = vsel %vm1054, %v978, %v1070
          %v1087 = vsel %vm1055, %v981, %v1071
          %v1088 = vsel %vm1056, %v986, %v1072
          %v1089 = vsel %vm1057, %v989, %v1073
          %v1090 = vsel %vm1058, %v994, %v1074
          %v1091 = vsel %vm1059, %v997, %v1075
          %v1092 = vsel %vm1060, %v1002, %v1076
          %v1093 = vsel %vm1061, %v1005, %v1077
          %v1094 = vsel %vm1062, %v1010, %v1078
          %v1095 = vsel %vm1063, %v1013, %v1079
          %v1096 = vsel %vm1064, %v1018, %v1080
          %v1097 = vsel %vm1065, %v1021, %v1081
          %v1098 = vsel %vm1066, %v1026, %v1082
          %v1099 = vsel %vm1067, %v1029, %v1083
          %v1100 = vpack.c.bf16 %v1085, %v1084
          %v1101 = vpack.c.bf16 %v1087, %v1086
          %v1102 = vpack.c.bf16 %v1089, %v1088
          %v1103 = vpack.c.bf16 %v1091, %v1090
          %v1104 = vpack.c.bf16 %v1093, %v1092
          %v1105 = vpack.c.bf16 %v1095, %v1094
          %v1106 = vpack.c.bf16 %v1097, %v1096
          %v1107 = vpack.c.bf16 %v1099, %v1098
          %v1116 = vunpack.c.l.b16 %v1100
          %v1117 = vunpack.c.h.b16 %v1100
          %v1118 = vunpack.c.l.b16 %v1101
          %v1119 = vunpack.c.h.b16 %v1101
          %v1120 = vunpack.c.l.b16 %v1102
          %v1121 = vunpack.c.h.b16 %v1102
          %v1122 = vunpack.c.l.b16 %v1103
          %v1123 = vunpack.c.h.b16 %v1103
          %v1124 = vunpack.c.l.b16 %v1104
          %v1125 = vunpack.c.h.b16 %v1104
          %v1126 = vunpack.c.l.b16 %v1105
          %v1127 = vunpack.c.h.b16 %v1105
          %v1128 = vunpack.c.l.b16 %v1106
          %v1129 = vunpack.c.h.b16 %v1106
          %v1130 = vunpack.c.l.b16 %v1107
          %v1131 = vunpack.c.h.b16 %v1107
          %v1132 = vpack.c.b16 %v1116, %v1116
          %v1133 = vpack.c.b16 %v1117, %v1117
          %v1134 = vpack.c.b16 %v1118, %v1118
          %v1135 = vpack.c.b16 %v1119, %v1119
          %v1136 = vpack.c.b16 %v1120, %v1120
          %v1137 = vpack.c.b16 %v1121, %v1121
          %v1138 = vpack.c.b16 %v1122, %v1122
          %v1139 = vpack.c.b16 %v1123, %v1123
          %v1140 = vpack.c.b16 %v1124, %v1124
          %v1141 = vpack.c.b16 %v1125, %v1125
          %v1142 = vpack.c.b16 %v1126, %v1126
          %v1143 = vpack.c.b16 %v1127, %v1127
          %v1144 = vpack.c.b16 %v1128, %v1128
          %v1145 = vpack.c.b16 %v1129, %v1129
          %v1146 = vpack.c.b16 %v1130, %v1130
          %v1147 = vpack.c.b16 %v1131, %v1131
          %s1164 = smul.addr %s724, 4
          %s1165 = scalar_lea.vmem [#allocation3], %s1164
          %1166 = vst [vmem:[%s1165] sm:$0xf] %v1132
          %1167 = vst [vmem:[%s1165 + $0x4] sm:$0xf] %v1133
          %1168 = vst [vmem:[%s1165 + $0x8] sm:$0xf] %v1134
          %1169 = vst [vmem:[%s1165 + $0xc] sm:$0xf] %v1135
          %1170 = vst [vmem:[%s1165 + $0x10] sm:$0xf] %v1136
          %1171 = vst [vmem:[%s1165 + $0x14] sm:$0xf] %v1137
          %1172 = vst [vmem:[%s1165 + $0x18] sm:$0xf] %v1138
          %1173 = vst [vmem:[%s1165 + $0x1c] sm:$0xf] %v1139
          %1174 = vst [vmem:[%s1165 + $0x20] sm:$0xf] %v1140
          %1175 = vst [vmem:[%s1165 + $0x24] sm:$0xf] %v1141
          %1176 = vst [vmem:[%s1165 + $0x28] sm:$0xf] %v1142
          %1177 = vst [vmem:[%s1165 + $0x2c] sm:$0xf] %v1143
          %1178 = vst [vmem:[%s1165 + $0x30] sm:$0xf] %v1144
          %1179 = vst [vmem:[%s1165 + $0x34] sm:$0xf] %v1145
          %1180 = vst [vmem:[%s1165 + $0x38] sm:$0xf] %v1146
          %1181 = vst [vmem:[%s1165 + $0x3c] sm:$0xf] %v1147
        $region112: #{student_forward.1} parent=107 // pred_fallthru
          _
      $region108: #{student_forward.1} parent=31 // pred_fallthru
        _
      %p1182 = scmp.eq.s32.totalorder %s430, 1
      // Predicated region
      $region113: #{student_forward.1} parent=31 // pred_check
        %p1183 = pneg %p1182
      $region114: #{student_forward.1} parent=31 // pred_check_branch
        %1185 = sbr.rel (%p1183) target = $region116
      $region115: #{student_forward.1} parent=31 // pred_region
        %s1186 = sshra.s32 %s418, 5
        %s1187 = sand.u32 %s418, 31
        %s1188 = smul.addr %s1186, 8
        %s1189 = scalar_lea.vmem [#allocation5], %s1188
        %v1190 = vld [vmem:[%s1189] sm:$0xff]
        %v1191 = vld [vmem:[%s1189 + $0x8] sm:$0xff]
        %v1192 = vld [vmem:[%s1189 + $0x10] sm:$0xff]
        %v1193 = vld [vmem:[%s1189 + $0x18] sm:$0xff]
        %v1194 = vunpack.c.l.s8.bf16 %v1190
        %v1195 = vunpack.c.h.s8.bf16 %v1190
        %v1196 = vunpack.c.l.s8.bf16 %v1191
        %v1197 = vunpack.c.h.s8.bf16 %v1191
        %v1198 = vunpack.c.l.s8.bf16 %v1192
        %v1199 = vunpack.c.h.s8.bf16 %v1192
        %v1200 = vunpack.c.l.s8.bf16 %v1193
        %v1201 = vunpack.c.h.s8.bf16 %v1193
        %v1202 = vld [vmem:[#allocation3] sm:$0xf]
        %v1203 = vld [vmem:[#allocation3 + $0x4] sm:$0xf]
        %v1204 = vld [vmem:[#allocation3 + $0x8] sm:$0xf]
        %v1205 = vld [vmem:[#allocation3 + $0xc] sm:$0xf]
        %v1206 = vld [vmem:[#allocation3 + $0x10] sm:$0xf]
        %v1207 = vld [vmem:[#allocation3 + $0x14] sm:$0xf]
        %v1208 = vld [vmem:[#allocation3 + $0x18] sm:$0xf]
        %v1209 = vld [vmem:[#allocation3 + $0x1c] sm:$0xf]
        %v1210 = vld [vmem:[#allocation3 + $0x20] sm:$0xf]
        %v1211 = vld [vmem:[#allocation3 + $0x24] sm:$0xf]
        %v1212 = vld [vmem:[#allocation3 + $0x28] sm:$0xf]
        %v1213 = vld [vmem:[#allocation3 + $0x2c] sm:$0xf]
        %v1214 = vld [vmem:[#allocation3 + $0x30] sm:$0xf]
        %v1215 = vld [vmem:[#allocation3 + $0x34] sm:$0xf]
        %v1216 = vld [vmem:[#allocation3 + $0x38] sm:$0xf]
        %v1217 = vld [vmem:[#allocation3 + $0x3c] sm:$0xf]
        %v1234 = vunpack.c.l.b16 %v1202
        %v1235 = vunpack.c.l.b16 %v1203
        %v1236 = vunpack.c.l.b16 %v1204
        %v1237 = vunpack.c.l.b16 %v1205
        %v1238 = vunpack.c.l.b16 %v1206
        %v1239 = vunpack.c.l.b16 %v1207
        %v1240 = vunpack.c.l.b16 %v1208
        %v1241 = vunpack.c.l.b16 %v1209
        %v1242 = vunpack.c.l.b16 %v1210
        %v1243 = vunpack.c.l.b16 %v1211
        %v1244 = vunpack.c.l.b16 %v1212
        %v1245 = vunpack.c.l.b16 %v1213
        %v1246 = vunpack.c.l.b16 %v1214
        %v1247 = vunpack.c.l.b16 %v1215
        %v1248 = vunpack.c.l.b16 %v1216
        %v1249 = vunpack.c.l.b16 %v1217
        %v1250 = vpack.c.b16 %v1235, %v1234
        %v1251 = vpack.c.b16 %v1237, %v1236
        %v1252 = vpack.c.b16 %v1239, %v1238
        %v1253 = vpack.c.b16 %v1241, %v1240
        %v1254 = vpack.c.b16 %v1243, %v1242
        %v1255 = vpack.c.b16 %v1245, %v1244
        %v1256 = vpack.c.b16 %v1247, %v1246
        %v1257 = vpack.c.b16 %v1249, %v1248
        %1266 = vmatprep.subr.bf16.mxu0 0
        %1267 = vmatpush1.bf16.msra.mxu0 %v1257
        %1268 = vmatprep.subr.bf16.mxu0 0
        %1269 = vmatpush1.bf16.msra.mxu0 %v1256
        %1270 = vmatprep.subr.bf16.mxu0 0
        %1271 = vmatpush1.bf16.msra.mxu0 %v1255
        %1272 = vmatprep.subr.bf16.mxu0 0
        %1273 = vmatpush1.bf16.msra.mxu0 %v1254
        %1274 = vmatprep.subr.bf16.mxu0 0
        %1275 = vmatpush1.bf16.msra.mxu0 %v1253
        %1276 = vmatprep.subr.bf16.mxu0 0
        %1277 = vmatpush1.bf16.msra.mxu0 %v1252
        %1278 = vmatprep.subr.bf16.mxu0 0
        %1279 = vmatpush1.bf16.msra.mxu0 %v1251
        %1280 = vmatprep.subr.bf16.mxu0 0
        %1281 = vmatpush1.bf16.msra.mxu0 %v1250
        %1282 = vmatprep.subr.bf16.mxu0 0
        %1283 = vmatpush2.bf16.msra.mxu0 0
        %1284 = vmatprep.subr.bf16.mxu0 0
        %1285 = vmatpush2.bf16.msra.mxu0 0
        %1286 = vmatprep.subr.bf16.mxu0 0
        %1287 = vmatpush2.bf16.msra.mxu0 0
        %1288 = vmatprep.subr.bf16.mxu0 0
        %1289 = vmatpush2.bf16.msra.mxu0 0
        %1290 = vmatprep.subr.bf16.mxu0 0
        %1291 = vmatpush2.bf16.msra.mxu0 0
        %1292 = vmatprep.subr.bf16.mxu0 0
        %1293 = vmatpush2.bf16.msra.mxu0 0
        %1294 = vmatprep.subr.bf16.mxu0 0
        %1295 = vmatpush2.bf16.msra.mxu0 0
        %1296 = vmatprep.subr.bf16.mxu0 0
        %1297 = vmatpush2.bf16.msra.mxu0 0
        %1298 = vmatprep.mubr.bf16.mxu0 0
        %1299 = vmatmul.mubr.bf16.gmra.mxu0 %v1194
        %v1300 = vpop.f32.mrf.mxu0
        %v1301 = vadd.f32 0.0, %v1300
        %v1302 = vpop.f32.mrf.mxu0
        %v1303 = vpop.f32.mrf.mxu0
        %v1304 = vadd.f32 0.0, %v1303
        %v1305 = vpop.f32.mrf.mxu0
        %1306 = vmatprep.mubr.bf16.mxu0 0
        %1307 = vmatmul.mubr.bf16.gmra.mxu0 %v1195
        %v1308 = vpop.f32.mrf.mxu0
        %v1309 = vadd.f32 0.0, %v1308
        %v1310 = vpop.f32.mrf.mxu0
        %v1311 = vpop.f32.mrf.mxu0
        %v1312 = vadd.f32 0.0, %v1311
        %v1313 = vpop.f32.mrf.mxu0
        %1314 = vmatprep.mubr.bf16.mxu0 0
        %1315 = vmatmul.mubr.bf16.gmra.mxu0 %v1196
        %v1316 = vpop.f32.mrf.mxu0
        %v1317 = vadd.f32 0.0, %v1316
        %v1318 = vpop.f32.mrf.mxu0
        %v1319 = vpop.f32.mrf.mxu0
        %v1320 = vadd.f32 0.0, %v1319
        %v1321 = vpop.f32.mrf.mxu0
        %1322 = vmatprep.mubr.bf16.mxu0 0
        %1323 = vmatmul.mubr.bf16.gmra.mxu0 %v1197
        %v1324 = vpop.f32.mrf.mxu0
        %v1325 = vadd.f32 0.0, %v1324
        %v1326 = vpop.f32.mrf.mxu0
        %v1327 = vpop.f32.mrf.mxu0
        %v1328 = vadd.f32 0.0, %v1327
        %v1329 = vpop.f32.mrf.mxu0
        %1330 = vmatprep.mubr.bf16.mxu0 0
        %1331 = vmatmul.mubr.bf16.gmra.mxu0 %v1198
        %v1332 = vpop.f32.mrf.mxu0
        %v1333 = vadd.f32 0.0, %v1332
        %v1334 = vpop.f32.mrf.mxu0
        %v1335 = vpop.f32.mrf.mxu0
        %v1336 = vadd.f32 0.0, %v1335
        %v1337 = vpop.f32.mrf.mxu0
        %1338 = vmatprep.mubr.bf16.mxu0 0
        %1339 = vmatmul.mubr.bf16.gmra.mxu0 %v1199
        %v1340 = vpop.f32.mrf.mxu0
        %v1341 = vadd.f32 0.0, %v1340
        %v1342 = vpop.f32.mrf.mxu0
        %v1343 = vpop.f32.mrf.mxu0
        %v1344 = vadd.f32 0.0, %v1343
        %v1345 = vpop.f32.mrf.mxu0
        %1346 = vmatprep.mubr.bf16.mxu0 0
        %1347 = vmatmul.mubr.bf16.gmra.mxu0 %v1200
        %v1348 = vpop.f32.mrf.mxu0
        %v1349 = vadd.f32 0.0, %v1348
        %v1350 = vpop.f32.mrf.mxu0
        %v1351 = vpop.f32.mrf.mxu0
        %v1352 = vadd.f32 0.0, %v1351
        %v1353 = vpop.f32.mrf.mxu0
        %1354 = vmatprep.mubr.bf16.mxu0 0
        %1355 = vmatmul.mubr.bf16.gmra.mxu0 %v1201
        %v1356 = vpop.f32.mrf.mxu0
        %v1357 = vadd.f32 0.0, %v1356
        %v1358 = vpop.f32.mrf.mxu0
        %v1359 = vpop.f32.mrf.mxu0
        %v1360 = vadd.f32 0.0, %v1359
        %v1361 = vpop.f32.mrf.mxu0
        %1362 = vdwg.mxu0
        %v1363 = vld [vmem:[%s212] sm:$0xff]
        %v1364 = vld [vmem:[%s212 + $0x8] sm:$0xff]
        %v1365 = vld [vmem:[%s212 + $0x10] sm:$0xff]
        %v1366 = vld [vmem:[%s212 + $0x18] sm:$0xff]
        %v1367 = vld [vmem:[%s212 + $0x20] sm:$0xff]
        %v1368 = vld [vmem:[%s212 + $0x28] sm:$0xff]
        %v1369 = vld [vmem:[%s212 + $0x30] sm:$0xff]
        %v1370 = vld [vmem:[%s212 + $0x38] sm:$0xff]
        %v1371 = vld [vmem:[%s212 + $0x40] sm:$0xff]
        %v1372 = vld [vmem:[%s212 + $0x48] sm:$0xff]
        %v1373 = vld [vmem:[%s212 + $0x50] sm:$0xff]
        %v1374 = vld [vmem:[%s212 + $0x58] sm:$0xff]
        %v1375 = vld [vmem:[%s212 + $0x60] sm:$0xff]
        %v1376 = vld [vmem:[%s212 + $0x68] sm:$0xff]
        %v1377 = vld [vmem:[%s212 + $0x70] sm:$0xff]
        %v1378 = vld [vmem:[%s212 + $0x78] sm:$0xff]
        %1380 = vset.pattern.permute.xlu0 0
        %1381 = vperm.xlu0 %1380, %v1363
        %v1382 = vpop.permute.xlu0 %1381
        %1385 = vset.pattern.permute.xlu0 0
        %1386 = vperm.xlu0 %1385, %v1364
        %v1387 = vpop.permute.xlu0 %1386
        %1390 = vset.pattern.permute.xlu0 0
        %1391 = vperm.xlu0 %1390, %v1365
        %v1392 = vpop.permute.xlu0 %1391
        %1395 = vset.pattern.permute.xlu0 0
        %1396 = vperm.xlu0 %1395, %v1366
        %v1397 = vpop.permute.xlu0 %1396
        %1400 = vset.pattern.permute.xlu0 0
        %1401 = vperm.xlu0 %1400, %v1367
        %v1402 = vpop.permute.xlu0 %1401
        %1405 = vset.pattern.permute.xlu0 0
        %1406 = vperm.xlu0 %1405, %v1368
        %v1407 = vpop.permute.xlu0 %1406
        %1410 = vset.pattern.permute.xlu0 0
        %1411 = vperm.xlu0 %1410, %v1369
        %v1412 = vpop.permute.xlu0 %1411
        %1415 = vset.pattern.permute.xlu0 0
        %1416 = vperm.xlu0 %1415, %v1370
        %v1417 = vpop.permute.xlu0 %1416
        %1420 = vset.pattern.permute.xlu0 0
        %1421 = vperm.xlu0 %1420, %v1371
        %v1422 = vpop.permute.xlu0 %1421
        %1425 = vset.pattern.permute.xlu0 0
        %1426 = vperm.xlu0 %1425, %v1372
        %v1427 = vpop.permute.xlu0 %1426
        %1430 = vset.pattern.permute.xlu0 0
        %1431 = vperm.xlu0 %1430, %v1373
        %v1432 = vpop.permute.xlu0 %1431
        %1435 = vset.pattern.permute.xlu0 0
        %1436 = vperm.xlu0 %1435, %v1374
        %v1437 = vpop.permute.xlu0 %1436
        %1440 = vset.pattern.permute.xlu0 0
        %1441 = vperm.xlu0 %1440, %v1375
        %v1442 = vpop.permute.xlu0 %1441
        %1445 = vset.pattern.permute.xlu0 0
        %1446 = vperm.xlu0 %1445, %v1376
        %v1447 = vpop.permute.xlu0 %1446
        %1450 = vset.pattern.permute.xlu0 0
        %1451 = vperm.xlu0 %1450, %v1377
        %v1452 = vpop.permute.xlu0 %1451
        %1455 = vset.pattern.permute.xlu0 0
        %1456 = vperm.xlu0 %1455, %v1378
        %v1457 = vpop.permute.xlu0 %1456
        %v1459 = vmul.f32 %v1301, %v1382
        %v1460 = vmul.f32 %v1304, %v1387
        %v1461 = vmul.f32 %v1309, %v1392
        %v1462 = vmul.f32 %v1312, %v1397
        %v1463 = vmul.f32 %v1317, %v1402
        %v1464 = vmul.f32 %v1320, %v1407
        %v1465 = vmul.f32 %v1325, %v1412
        %v1466 = vmul.f32 %v1328, %v1417
        %v1467 = vmul.f32 %v1333, %v1422
        %v1468 = vmul.f32 %v1336, %v1427
        %v1469 = vmul.f32 %v1341, %v1432
        %v1470 = vmul.f32 %v1344, %v1437
        %v1471 = vmul.f32 %v1349, %v1442
        %v1472 = vmul.f32 %v1352, %v1447
        %v1473 = vmul.f32 %v1357, %v1452
        %v1474 = vmul.f32 %v1360, %v1457
        %s1475 = sshra.s32 %s418, 3
        %s1476 = sand.u32 %s418, 7
        %s1477 = smul.addr %s1475, 4
        %s1478 = scalar_lea.vmem [#allocation3], %s1477
        %v1479 = vld [vmem:[%s1478] sm:$0xf]
        %v1480 = vld [vmem:[%s1478 + $0x4] sm:$0xf]
        %v1481 = vld [vmem:[%s1478 + $0x8] sm:$0xf]
        %v1482 = vld [vmem:[%s1478 + $0xc] sm:$0xf]
        %v1483 = vld [vmem:[%s1478 + $0x10] sm:$0xf]
        %v1484 = vld [vmem:[%s1478 + $0x14] sm:$0xf]
        %v1485 = vld [vmem:[%s1478 + $0x18] sm:$0xf]
        %v1486 = vld [vmem:[%s1478 + $0x1c] sm:$0xf]
        %v1487 = vld [vmem:[%s1478 + $0x20] sm:$0xf]
        %v1488 = vld [vmem:[%s1478 + $0x24] sm:$0xf]
        %v1489 = vld [vmem:[%s1478 + $0x28] sm:$0xf]
        %v1490 = vld [vmem:[%s1478 + $0x2c] sm:$0xf]
        %v1491 = vld [vmem:[%s1478 + $0x30] sm:$0xf]
        %v1492 = vld [vmem:[%s1478 + $0x34] sm:$0xf]
        %v1493 = vld [vmem:[%s1478 + $0x38] sm:$0xf]
        %v1494 = vld [vmem:[%s1478 + $0x3c] sm:$0xf]
        %v1495 = vpack.c.bf16 %v1460, %v1459
        %v1496 = vpack.c.bf16 %v1462, %v1461
        %v1497 = vpack.c.bf16 %v1464, %v1463
        %v1498 = vpack.c.bf16 %v1466, %v1465
        %v1499 = vpack.c.bf16 %v1468, %v1467
        %v1500 = vpack.c.bf16 %v1470, %v1469
        %v1501 = vpack.c.bf16 %v1472, %v1471
        %v1502 = vpack.c.bf16 %v1474, %v1473
        %v1519 = vunpack.c.l.b16 %v1479
        %v1520 = vunpack.c.l.b16 %v1480
        %v1521 = vunpack.c.l.b16 %v1481
        %v1522 = vunpack.c.l.b16 %v1482
        %v1523 = vunpack.c.l.b16 %v1483
        %v1524 = vunpack.c.l.b16 %v1484
        %v1525 = vunpack.c.l.b16 %v1485
        %v1526 = vunpack.c.l.b16 %v1486
        %v1527 = vunpack.c.l.b16 %v1487
        %v1528 = vunpack.c.l.b16 %v1488
        %v1529 = vunpack.c.l.b16 %v1489
        %v1530 = vunpack.c.l.b16 %v1490
        %v1531 = vunpack.c.l.b16 %v1491
        %v1532 = vunpack.c.l.b16 %v1492
        %v1533 = vunpack.c.l.b16 %v1493
        %v1534 = vunpack.c.l.b16 %v1494
        %v1535 = vpack.c.b16 %v1520, %v1519
        %v1536 = vpack.c.b16 %v1522, %v1521
        %v1537 = vpack.c.b16 %v1524, %v1523
        %v1538 = vpack.c.b16 %v1526, %v1525
        %v1539 = vpack.c.b16 %v1528, %v1527
        %v1540 = vpack.c.b16 %v1530, %v1529
        %v1541 = vpack.c.b16 %v1532, %v1531
        %v1542 = vpack.c.b16 %v1534, %v1533
        %v1551 = vld [vmem:[%s218] sm:$0xf]
        %v1552 = vld [vmem:[%s218 + $0x4] sm:$0xf]
        %v1553 = vld [vmem:[%s218 + $0x8] sm:$0xf]
        %v1554 = vld [vmem:[%s218 + $0xc] sm:$0xf]
        %v1555 = vld [vmem:[%s218 + $0x10] sm:$0xf]
        %v1556 = vld [vmem:[%s218 + $0x14] sm:$0xf]
        %v1557 = vld [vmem:[%s218 + $0x18] sm:$0xf]
        %v1558 = vld [vmem:[%s218 + $0x1c] sm:$0xf]
        %v1559 = vld [vmem:[%s218 + $0x20] sm:$0xf]
        %v1560 = vld [vmem:[%s218 + $0x24] sm:$0xf]
        %v1561 = vld [vmem:[%s218 + $0x28] sm:$0xf]
        %v1562 = vld [vmem:[%s218 + $0x2c] sm:$0xf]
        %v1563 = vld [vmem:[%s218 + $0x30] sm:$0xf]
        %v1564 = vld [vmem:[%s218 + $0x34] sm:$0xf]
        %v1565 = vld [vmem:[%s218 + $0x38] sm:$0xf]
        %v1566 = vld [vmem:[%s218 + $0x3c] sm:$0xf]
        %v1567 = vld [vmem:[%s218 + $0x40] sm:$0xf]
        %v1568 = vld [vmem:[%s218 + $0x44] sm:$0xf]
        %v1569 = vld [vmem:[%s218 + $0x48] sm:$0xf]
        %v1570 = vld [vmem:[%s218 + $0x4c] sm:$0xf]
        %v1571 = vld [vmem:[%s218 + $0x50] sm:$0xf]
        %v1572 = vld [vmem:[%s218 + $0x54] sm:$0xf]
        %v1573 = vld [vmem:[%s218 + $0x58] sm:$0xf]
        %v1574 = vld [vmem:[%s218 + $0x5c] sm:$0xf]
        %v1575 = vld [vmem:[%s218 + $0x60] sm:$0xf]
        %v1576 = vld [vmem:[%s218 + $0x64] sm:$0xf]
        %v1577 = vld [vmem:[%s218 + $0x68] sm:$0xf]
        %v1578 = vld [vmem:[%s218 + $0x6c] sm:$0xf]
        %v1579 = vld [vmem:[%s218 + $0x70] sm:$0xf]
        %v1580 = vld [vmem:[%s218 + $0x74] sm:$0xf]
        %v1581 = vld [vmem:[%s218 + $0x78] sm:$0xf]
        %v1582 = vld [vmem:[%s218 + $0x7c] sm:$0xf]
        %v1583 = vld [vmem:[%s221] sm:$0x1]
        %v1585 = vlaneseq
        %v1586 = vshrl.u32 %v1585, 7
        %v1587 = vsub.s32 0, %v1586
        %v1588 = vrot.slane %v1583, %v1587
        %v1622 = vunpack.c.l.b16 %v1551
        %v1623 = vunpack.c.l.b16 %v1552
        %v1624 = vunpack.c.l.b16 %v1553
        %v1625 = vunpack.c.l.b16 %v1554
        %v1626 = vunpack.c.l.b16 %v1555
        %v1627 = vunpack.c.l.b16 %v1556
        %v1628 = vunpack.c.l.b16 %v1557
        %v1629 = vunpack.c.l.b16 %v1558
        %v1630 = vunpack.c.l.b16 %v1559
        %v1631 = vunpack.c.l.b16 %v1560
        %v1632 = vunpack.c.l.b16 %v1561
        %v1633 = vunpack.c.l.b16 %v1562
        %v1634 = vunpack.c.l.b16 %v1563
        %v1635 = vunpack.c.l.b16 %v1564
        %v1636 = vunpack.c.l.b16 %v1565
        %v1637 = vunpack.c.l.b16 %v1566
        %v1638 = vunpack.c.l.b16 %v1567
        %v1639 = vunpack.c.l.b16 %v1568
        %v1640 = vunpack.c.l.b16 %v1569
        %v1641 = vunpack.c.l.b16 %v1570
        %v1642 = vunpack.c.l.b16 %v1571
        %v1643 = vunpack.c.l.b16 %v1572
        %v1644 = vunpack.c.l.b16 %v1573
        %v1645 = vunpack.c.l.b16 %v1574
        %v1646 = vunpack.c.l.b16 %v1575
        %v1647 = vunpack.c.l.b16 %v1576
        %v1648 = vunpack.c.l.b16 %v1577
        %v1649 = vunpack.c.l.b16 %v1578
        %v1650 = vunpack.c.l.b16 %v1579
        %v1651 = vunpack.c.l.b16 %v1580
        %v1652 = vunpack.c.l.b16 %v1581
        %v1653 = vunpack.c.l.b16 %v1582
        %v1654 = vpack.c.b16 %v1623, %v1622
        %v1655 = vpack.c.b16 %v1625, %v1624
        %v1656 = vpack.c.b16 %v1627, %v1626
        %v1657 = vpack.c.b16 %v1629, %v1628
        %v1658 = vpack.c.b16 %v1631, %v1630
        %v1659 = vpack.c.b16 %v1633, %v1632
        %v1660 = vpack.c.b16 %v1635, %v1634
        %v1661 = vpack.c.b16 %v1637, %v1636
        %v1662 = vpack.c.b16 %v1639, %v1638
        %v1663 = vpack.c.b16 %v1641, %v1640
        %v1664 = vpack.c.b16 %v1643, %v1642
        %v1665 = vpack.c.b16 %v1645, %v1644
        %v1666 = vpack.c.b16 %v1647, %v1646
        %v1667 = vpack.c.b16 %v1649, %v1648
        %v1668 = vpack.c.b16 %v1651, %v1650
        %v1669 = vpack.c.b16 %v1653, %v1652
        %1686 = vmatprep.subr.bf16.mxu0 0
        %1687 = vmatpush1.bf16.msra.mxu0 %v1661
        %1688 = vmatprep.subr.bf16.mxu0 0
        %1689 = vmatpush1.bf16.msra.mxu0 %v1660
        %1690 = vmatprep.subr.bf16.mxu0 0
        %1691 = vmatpush1.bf16.msra.mxu0 %v1659
        %1692 = vmatprep.subr.bf16.mxu0 0
        %1693 = vmatpush1.bf16.msra.mxu0 %v1658
        %1694 = vmatprep.subr.bf16.mxu0 0
        %1695 = vmatpush1.bf16.msra.mxu0 %v1657
        %1696 = vmatprep.subr.bf16.mxu0 0
        %1697 = vmatpush1.bf16.msra.mxu0 %v1656
        %1698 = vmatprep.subr.bf16.mxu0 0
        %1699 = vmatpush1.bf16.msra.mxu0 %v1655
        %1700 = vmatprep.subr.bf16.mxu0 0
        %1701 = vmatpush1.bf16.msra.mxu0 %v1654
        %1702 = vmatprep.subr.bf16.mxu0 0
        %1703 = vmatpush2.bf16.msra.mxu0 %v1669
        %1704 = vmatprep.subr.bf16.mxu0 0
        %1705 = vmatpush2.bf16.msra.mxu0 %v1668
        %1706 = vmatprep.subr.bf16.mxu0 0
        %1707 = vmatpush2.bf16.msra.mxu0 %v1667
        %1708 = vmatprep.subr.bf16.mxu0 0
        %1709 = vmatpush2.bf16.msra.mxu0 %v1666
        %1710 = vmatprep.subr.bf16.mxu0 0
        %1711 = vmatpush2.bf16.msra.mxu0 %v1665
        %1712 = vmatprep.subr.bf16.mxu0 0
        %1713 = vmatpush2.bf16.msra.mxu0 %v1664
        %1714 = vmatprep.subr.bf16.mxu0 0
        %1715 = vmatpush2.bf16.msra.mxu0 %v1663
        %1716 = vmatprep.subr.bf16.mxu0 0
        %1717 = vmatpush2.bf16.msra.mxu0 %v1662
        %1718 = vmatprep.mubr.bf16.mxu0 %v1535
        %1719 = vmatmul.mubr.bf16.gmra.mxu0 %v1495
        %v1720 = vpop.f32.mrf.mxu0
        %v1721 = vadd.f32 %v1588, %v1720
        %v1722 = vpop.f32.mrf.mxu0
        %v1723 = vpop.f32.mrf.mxu0
        %v1724 = vadd.f32 %v1588, %v1723
        %v1725 = vpop.f32.mrf.mxu0
        %1726 = vmatprep.mubr.bf16.mxu0 %v1536
        %1727 = vmatmul.mubr.bf16.gmra.mxu0 %v1496
        %v1728 = vpop.f32.mrf.mxu0
        %v1729 = vadd.f32 %v1588, %v1728
        %v1730 = vpop.f32.mrf.mxu0
        %v1731 = vpop.f32.mrf.mxu0
        %v1732 = vadd.f32 %v1588, %v1731
        %v1733 = vpop.f32.mrf.mxu0
        %1734 = vmatprep.mubr.bf16.mxu0 %v1537
        %1735 = vmatmul.mubr.bf16.gmra.mxu0 %v1497
        %v1736 = vpop.f32.mrf.mxu0
        %v1737 = vadd.f32 %v1588, %v1736
        %v1738 = vpop.f32.mrf.mxu0
        %v1739 = vpop.f32.mrf.mxu0
        %v1740 = vadd.f32 %v1588, %v1739
        %v1741 = vpop.f32.mrf.mxu0
        %1742 = vmatprep.mubr.bf16.mxu0 %v1538
        %1743 = vmatmul.mubr.bf16.gmra.mxu0 %v1498
        %v1744 = vpop.f32.mrf.mxu0
        %v1745 = vadd.f32 %v1588, %v1744
        %v1746 = vpop.f32.mrf.mxu0
        %v1747 = vpop.f32.mrf.mxu0
        %v1748 = vadd.f32 %v1588, %v1747
        %v1749 = vpop.f32.mrf.mxu0
        %1750 = vmatprep.mubr.bf16.mxu0 %v1539
        %1751 = vmatmul.mubr.bf16.gmra.mxu0 %v1499
        %v1752 = vpop.f32.mrf.mxu0
        %v1753 = vadd.f32 %v1588, %v1752
        %v1754 = vpop.f32.mrf.mxu0
        %v1755 = vpop.f32.mrf.mxu0
        %v1756 = vadd.f32 %v1588, %v1755
        %v1757 = vpop.f32.mrf.mxu0
        %1758 = vmatprep.mubr.bf16.mxu0 %v1540
        %1759 = vmatmul.mubr.bf16.gmra.mxu0 %v1500
        %v1760 = vpop.f32.mrf.mxu0
        %v1761 = vadd.f32 %v1588, %v1760
        %v1762 = vpop.f32.mrf.mxu0
        %v1763 = vpop.f32.mrf.mxu0
        %v1764 = vadd.f32 %v1588, %v1763
        %v1765 = vpop.f32.mrf.mxu0
        %1766 = vmatprep.mubr.bf16.mxu0 %v1541
        %1767 = vmatmul.mubr.bf16.gmra.mxu0 %v1501
        %v1768 = vpop.f32.mrf.mxu0
        %v1769 = vadd.f32 %v1588, %v1768
        %v1770 = vpop.f32.mrf.mxu0
        %v1771 = vpop.f32.mrf.mxu0
        %v1772 = vadd.f32 %v1588, %v1771
        %v1773 = vpop.f32.mrf.mxu0
        %1774 = vmatprep.mubr.bf16.mxu0 %v1542
        %1775 = vmatmul.mubr.bf16.gmra.mxu0 %v1502
        %v1776 = vpop.f32.mrf.mxu0
        %v1777 = vadd.f32 %v1588, %v1776
        %v1778 = vpop.f32.mrf.mxu0
        %v1779 = vpop.f32.mrf.mxu0
        %v1780 = vadd.f32 %v1588, %v1779
        %v1781 = vpop.f32.mrf.mxu0
        %1782 = vdwg.mxu0
        %1783 = vst [vmem:[%s230] sm:$0xff] %v1721
        %1784 = vst [vmem:[%s230 + $0x8] sm:$0xff] %v1724
        %1785 = vst [vmem:[%s230 + $0x10] sm:$0xff] %v1729
        %1786 = vst [vmem:[%s230 + $0x18] sm:$0xff] %v1732
        %1787 = vst [vmem:[%s230 + $0x20] sm:$0xff] %v1737
        %1788 = vst [vmem:[%s230 + $0x28] sm:$0xff] %v1740
        %1789 = vst [vmem:[%s230 + $0x30] sm:$0xff] %v1745
        %1790 = vst [vmem:[%s230 + $0x38] sm:$0xff] %v1748
        %1791 = vst [vmem:[%s230 + $0x40] sm:$0xff] %v1753
        %1792 = vst [vmem:[%s230 + $0x48] sm:$0xff] %v1756
        %1793 = vst [vmem:[%s230 + $0x50] sm:$0xff] %v1761
        %1794 = vst [vmem:[%s230 + $0x58] sm:$0xff] %v1764
        %1795 = vst [vmem:[%s230 + $0x60] sm:$0xff] %v1769
        %1796 = vst [vmem:[%s230 + $0x68] sm:$0xff] %v1772
        %1797 = vst [vmem:[%s230 + $0x70] sm:$0xff] %v1777
        %1798 = vst [vmem:[%s230 + $0x78] sm:$0xff] %v1780
        %p1799 = scmp.lt.s32.totalorder %s20, 2
        // Predicated region
        $region117: #{student_forward.1} parent=115 // pred_check
          %p1800 = pneg %p1799
        $region118: #{student_forward.1} parent=115 // pred_check_branch
          %1802 = sbr.rel (%p1800) target = $region120
        $region119: #{student_forward.1} parent=115 // pred_region
          %vm1803 = vcmp.ge.f32.partialorder %v1721, 0.0
          %vm1804 = vcmp.ge.f32.partialorder %v1724, 0.0
          %vm1805 = vcmp.ge.f32.partialorder %v1729, 0.0
          %vm1806 = vcmp.ge.f32.partialorder %v1732, 0.0
          %vm1807 = vcmp.ge.f32.partialorder %v1737, 0.0
          %vm1808 = vcmp.ge.f32.partialorder %v1740, 0.0
          %vm1809 = vcmp.ge.f32.partialorder %v1745, 0.0
          %vm1810 = vcmp.ge.f32.partialorder %v1748, 0.0
          %vm1811 = vcmp.ge.f32.partialorder %v1753, 0.0
          %vm1812 = vcmp.ge.f32.partialorder %v1756, 0.0
          %vm1813 = vcmp.ge.f32.partialorder %v1761, 0.0
          %vm1814 = vcmp.ge.f32.partialorder %v1764, 0.0
          %vm1815 = vcmp.ge.f32.partialorder %v1769, 0.0
          %vm1816 = vcmp.ge.f32.partialorder %v1772, 0.0
          %vm1817 = vcmp.ge.f32.partialorder %v1777, 0.0
          %vm1818 = vcmp.ge.f32.partialorder %v1780, 0.0
          %v1819 = vmul.f32 %v1721, 0.01
          %v1820 = vmul.f32 %v1724, 0.01
          %v1821 = vmul.f32 %v1729, 0.01
          %v1822 = vmul.f32 %v1732, 0.01
          %v1823 = vmul.f32 %v1737, 0.01
          %v1824 = vmul.f32 %v1740, 0.01
          %v1825 = vmul.f32 %v1745, 0.01
          %v1826 = vmul.f32 %v1748, 0.01
          %v1827 = vmul.f32 %v1753, 0.01
          %v1828 = vmul.f32 %v1756, 0.01
          %v1829 = vmul.f32 %v1761, 0.01
          %v1830 = vmul.f32 %v1764, 0.01
          %v1831 = vmul.f32 %v1769, 0.01
          %v1832 = vmul.f32 %v1772, 0.01
          %v1833 = vmul.f32 %v1777, 0.01
          %v1834 = vmul.f32 %v1780, 0.01
          %v1835 = vsel %vm1803, %v1721, %v1819
          %v1836 = vsel %vm1804, %v1724, %v1820
          %v1837 = vsel %vm1805, %v1729, %v1821
          %v1838 = vsel %vm1806, %v1732, %v1822
          %v1839 = vsel %vm1807, %v1737, %v1823
          %v1840 = vsel %vm1808, %v1740, %v1824
          %v1841 = vsel %vm1809, %v1745, %v1825
          %v1842 = vsel %vm1810, %v1748, %v1826
          %v1843 = vsel %vm1811, %v1753, %v1827
          %v1844 = vsel %vm1812, %v1756, %v1828
          %v1845 = vsel %vm1813, %v1761, %v1829
          %v1846 = vsel %vm1814, %v1764, %v1830
          %v1847 = vsel %vm1815, %v1769, %v1831
          %v1848 = vsel %vm1816, %v1772, %v1832
          %v1849 = vsel %vm1817, %v1777, %v1833
          %v1850 = vsel %vm1818, %v1780, %v1834
          %v1851 = vpack.c.bf16 %v1836, %v1835
          %v1852 = vpack.c.bf16 %v1838, %v1837
          %v1853 = vpack.c.bf16 %v1840, %v1839
          %v1854 = vpack.c.bf16 %v1842, %v1841
          %v1855 = vpack.c.bf16 %v1844, %v1843
          %v1856 = vpack.c.bf16 %v1846, %v1845
          %v1857 = vpack.c.bf16 %v1848, %v1847
          %v1858 = vpack.c.bf16 %v1850, %v1849
          %v1867 = vunpack.c.l.b16 %v1851
          %v1868 = vunpack.c.h.b16 %v1851
          %v1869 = vunpack.c.l.b16 %v1852
          %v1870 = vunpack.c.h.b16 %v1852
          %v1871 = vunpack.c.l.b16 %v1853
          %v1872 = vunpack.c.h.b16 %v1853
          %v1873 = vunpack.c.l.b16 %v1854
          %v1874 = vunpack.c.h.b16 %v1854
          %v1875 = vunpack.c.l.b16 %v1855
          %v1876 = vunpack.c.h.b16 %v1855
          %v1877 = vunpack.c.l.b16 %v1856
          %v1878 = vunpack.c.h.b16 %v1856
          %v1879 = vunpack.c.l.b16 %v1857
          %v1880 = vunpack.c.h.b16 %v1857
          %v1881 = vunpack.c.l.b16 %v1858
          %v1882 = vunpack.c.h.b16 %v1858
          %v1883 = vpack.c.b16 %v1867, %v1867
          %v1884 = vpack.c.b16 %v1868, %v1868
          %v1885 = vpack.c.b16 %v1869, %v1869
          %v1886 = vpack.c.b16 %v1870, %v1870
          %v1887 = vpack.c.b16 %v1871, %v1871
          %v1888 = vpack.c.b16 %v1872, %v1872
          %v1889 = vpack.c.b16 %v1873, %v1873
          %v1890 = vpack.c.b16 %v1874, %v1874
          %v1891 = vpack.c.b16 %v1875, %v1875
          %v1892 = vpack.c.b16 %v1876, %v1876
          %v1893 = vpack.c.b16 %v1877, %v1877
          %v1894 = vpack.c.b16 %v1878, %v1878
          %v1895 = vpack.c.b16 %v1879, %v1879
          %v1896 = vpack.c.b16 %v1880, %v1880
          %v1897 = vpack.c.b16 %v1881, %v1881
          %v1898 = vpack.c.b16 %v1882, %v1882
          %s1915 = smul.addr %s1475, 4
          %s1916 = scalar_lea.vmem [#allocation2], %s1915
          %1917 = vst [vmem:[%s1916] sm:$0xf] %v1883
          %1918 = vst [vmem:[%s1916 + $0x4] sm:$0xf] %v1884
          %1919 = vst [vmem:[%s1916 + $0x8] sm:$0xf] %v1885
          %1920 = vst [vmem:[%s1916 + $0xc] sm:$0xf] %v1886
          %1921 = vst [vmem:[%s1916 + $0x10] sm:$0xf] %v1887
          %1922 = vst [vmem:[%s1916 + $0x14] sm:$0xf] %v1888
          %1923 = vst [vmem:[%s1916 + $0x18] sm:$0xf] %v1889
          %1924 = vst [vmem:[%s1916 + $0x1c] sm:$0xf] %v1890
          %1925 = vst [vmem:[%s1916 + $0x20] sm:$0xf] %v1891
          %1926 = vst [vmem:[%s1916 + $0x24] sm:$0xf] %v1892
          %1927 = vst [vmem:[%s1916 + $0x28] sm:$0xf] %v1893
          %1928 = vst [vmem:[%s1916 + $0x2c] sm:$0xf] %v1894
          %1929 = vst [vmem:[%s1916 + $0x30] sm:$0xf] %v1895
          %1930 = vst [vmem:[%s1916 + $0x34] sm:$0xf] %v1896
          %1931 = vst [vmem:[%s1916 + $0x38] sm:$0xf] %v1897
          %1932 = vst [vmem:[%s1916 + $0x3c] sm:$0xf] %v1898
        $region120: #{student_forward.1} parent=115 // pred_fallthru
          _
      $region116: #{student_forward.1} parent=31 // pred_fallthru
        _
      %s1933 = smul.u32 16, %s21
      %p1934 = scmp.lt.s32.totalorder %s20, 2
      %s1935 = scalar_select %p1934, %s20, 2
      %p1936 = scmp.lt.s32.totalorder %s1933, 15
      %s1937 = scalar_select %p1936, %s1933, 15
      %s1938 = smul.addr %s1935, 16
      %s1939 = sadd.s32 %s1937, %s1938
      %s1940 = smul.addr %s1939, 8
      %s1941 = scalar_lea.vmem %s5, %s1940
      // Predicated region
      $region121: #{student_forward.1} parent=31 // pred_check
        %p1942 = pneg %p126
      $region122: #{student_forward.1} parent=31 // pred_check_branch
        %1944 = sbr.rel (%p1942) target = $region124
      $region123: #{student_forward.1} parent=31 // pred_region
        %s1945 = smul.u32 16, %s21
      $region124: #{student_forward.1} parent=31 // pred_fallthru
        _
    $region32: #{student_forward.1} parent=5 // pred_fallthru
      _
    %p1946 = scmp.le.s32.totalorder 2, %s11
    // Predicated region
    $region125: #{student_forward.1} parent=5 // pred_check
      %p1947 = pneg %p1946
    $region126: #{student_forward.1} parent=5 // pred_check_branch
      %1949 = sbr.rel (%p1947) target = $region128
    $region127: #{student_forward.1} parent=5 // pred_region
      %s1950 = ssub.s32 %s11, 2
      // Predicated region
      $region129: #{student_forward.1} parent=127 // pred_check
        %p1951 = pneg %p132
      $region130: #{student_forward.1} parent=127 // pred_check_branch
        %1953 = sbr.rel (%p1951) target = $region132
      $region131: #{student_forward.1} parent=127 // pred_region
        %s1954 = smul.u32 16, %s23
        %p1955 = scmp.lt.s32.totalorder %s22, 2
        %s1956 = scalar_select %p1955, %s22, 2
        %p1957 = scmp.lt.s32.totalorder %s1954, 15
        %s1958 = scalar_select %p1957, %s1954, 15
        %s1959 = smul.addr %s1956, 16
        %s1960 = sadd.s32 %s1958, %s1959
        %s1961 = smul.addr %s1960, 8
        %s1962 = scalar_lea.vmem %s5, %s1961
      $region132: #{student_forward.1} parent=127 // pred_fallthru
        _
    $region128: #{student_forward.1} parent=5 // pred_fallthru
      _
  $region6: #{student_forward.1} parent=0 // loop_footer
    %s15 = sadd.s32 1, %s11
  $region7: #{student_forward.1} parent=0 // loop_footer_branch
    %10 = sbr.rel target = $region3
  $region8: #{student_forward.1} parent=0 // loop_exit
    _
  %1963 = vsyncmov [#allocation4]
  %s1964 = vpop.sfrf %1963
  %p1965 = scmp.eq.s32.totalorder %s1964, 0
  %p1966 = pneg %p1965
  %1968 = shalt.err (%p1966)
  %s1969 = scalar_lea.sflag [#allocation4], 1
  %1970 = vsyncmov %s1969
  %s1971 = vpop.sfrf %1970
  %p1972 = scmp.eq.s32.totalorder %s1971, 0
  %p1973 = pneg %p1972
  %1975 = shalt.err (%p1973)

</llo_original>
